<compile_context>
chip_gen: v5e
topology: v5e:2x2
jax: 0.10.0
libtpu: 0.0.40
codegen_flags: <defaults>
</compile_context>

<pallas_src>
import functools

import jax
import jax.numpy as jnp
from jax.experimental import pallas as pl
from jax.experimental.pallas import tpu as pltpu

EPS = 1e-5  # nn.BatchNorm2d default eps


def _round_up(x, m):
    return (x + m - 1) // m * m


def _fill_padded(pad_scr, interior, *, head, HW):
    """pad_scr = [head zeros | interior (C, HW) | tail zeros]; interior store
    starts at lane `head` (a multiple of 128 -> aligned, unmasked stores)."""
    C = pad_scr.shape[0]
    tail = pad_scr.shape[1] - head - HW
    pad_scr[:, :head] = jnp.zeros((C, head), pad_scr.dtype)
    pad_scr[:, head:head + HW] = interior.astype(pad_scr.dtype)
    pad_scr[:, head + HW:] = jnp.zeros((C, tail), pad_scr.dtype)


def _conv3x3_taps(src_ref, w_ref, *, H, W, head, cdt):
    """3x3 'same' conv as 9 accumulated tap matmuls (no im2col staging).

    src_ref: (C, head + H*W + W+1) f32 VMEM scratch; [head, head+H*W) holds
             the row-major flattened activation, the rest is zero halo.
    w_ref:   (9, Cout, C) weights, tap-major (kh*3 + kw).
    Returns  (Cout, H*W) f32.

    Row-boundary handling: vertical out-of-image taps read the zero halos;
    horizontal out-of-image taps are zeroed by the two column masks below.
    """
    HW = H * W

    def tap_group(b):  # b = kw - 1; accumulate the three kh taps sharing mask
        acc = None
        for a in (-1, 0, 1):  # a = kh - 1
            k = (a + 1) * 3 + (b + 1)
            start = head + a * W + b
            sl = src_ref[:, start:start + HW].astype(cdt)   # bf16 MXU operand
            t = jnp.dot(w_ref[k], sl, preferred_element_type=jnp.float32)
            acc = t if acc is None else acc + t
        return acc

    col = jax.lax.broadcasted_iota(jnp.int32, (1, HW), 1) % W
    y = tap_group(0)
    y = y + jnp.where(col >= 1, tap_group(-1), 0.0)      # kw=0 taps need w-1 >= 0
    y = y + jnp.where(col <= W - 2, tap_group(1), 0.0)   # kw=2 taps need w+1 <  W
    return y


def _write_conv_and_stats(y, raw_ref, st_ref):
    raw_ref[...] = y.astype(raw_ref.dtype)
    ssum = jnp.sum(y, axis=1, keepdims=True)        # per-channel sum
    ssq = jnp.sum(y * y, axis=1, keepdims=True)     # per-channel sum of squares
    lane2 = jax.lax.broadcasted_iota(jnp.int32, (1, 2), 1)
    st_ref[...] = jnp.where(lane2 == 0, ssum, ssq)  # single (C, 2) store


def _bn_scale_shift(stats, gamma, beta, count):
    """Fold training-mode batch stats + affine params into per-channel scale/shift."""
    s = jnp.sum(stats[:, :, 0], axis=0)
    sq = jnp.sum(stats[:, :, 1], axis=0)
    mean = s / count
    var = jnp.maximum(sq / count - mean * mean, 0.0)   # single-pass, f32
    scale = gamma.astype(jnp.float32) * jax.lax.rsqrt(var + EPS)
    shift = beta.astype(jnp.float32) - mean * scale
    return scale[:, None], shift[:, None]              # (C, 1) for lane broadcast


def double_conv_forward(x_nchw, p, *, compute_dtype=jnp.bfloat16):
    N, Cin, H, W = x_nchw.shape
    Cout = p["w1"].shape[0]
    HW = H * W
    head = _round_up(W + 1, 128)          # halo >= W+1, aligned interior store
    tail = W + 1
    padw = head + HW + tail
    count = N * H * W
    cdt = compute_dtype
    assert head >= W + 1                   # tap slices must stay inside the halos

    # NCHW -> (N, C, H*W): contiguous reshape, no pad / no extra HBM round trip.
    xflat = x_nchw.reshape(N, Cin, HW)

    # OIHW -> (9, Cout, Cin), tap-major (kh*3+kw); cast weights to compute dtype.
    w1 = jnp.transpose(p["w1"], (2, 3, 0, 1)).reshape(9, Cout, Cin).astype(cdt)
    w2 = jnp.transpose(p["w2"], (2, 3, 0, 1)).reshape(9, Cout, Cout).astype(cdt)
    # Conv biases b1/b2 intentionally unused: bias + training-mode BN cancels.

    # ---------------- kernels ----------------
    def conv1_kernel(x_ref, w_ref, raw_ref, st_ref, pad_scr):
        _fill_padded(pad_scr, x_ref[...], head=head, HW=HW)
        y = _conv3x3_taps(pad_scr, w_ref, H=H, W=W, head=head, cdt=cdt)
        _write_conv_and_stats(y, raw_ref, st_ref)

    def conv2_kernel(raw1_ref, sc_ref, sh_ref, w_ref, raw_ref, st_ref, pad_scr):
        z = jnp.maximum(                                       # BN1 + ReLU in f32
            raw1_ref[...].astype(jnp.float32) * sc_ref[...] + sh_ref[...], 0.0)
        _fill_padded(pad_scr, z, head=head, HW=HW)
        y = _conv3x3_taps(pad_scr, w_ref, H=H, W=W, head=head, cdt=cdt)
        _write_conv_and_stats(y, raw_ref, st_ref)

    def bn_relu_kernel(raw_ref, sc_ref, sh_ref, o_ref):
        o_ref[...] = jnp.maximum(
            raw_ref[...].astype(jnp.float32) * sc_ref[...] + sh_ref[...],
            0.0).astype(o_ref.dtype)

    # ---------------- specs ----------------
    per_n = lambda *rest: pl.BlockSpec((None,) + tuple(rest),
                                       lambda n: (n,) + (0,) * len(rest))
    full = lambda *shape: pl.BlockSpec(tuple(shape), lambda n: (0,) * len(shape))
    cparams = pltpu.CompilerParams(
        dimension_semantics=("parallel",),          # v7x: batch splits across 2 TCs
        vmem_limit_bytes=48 * 1024 * 1024)          # > default scoped, < v7x physical

    # ---------------- pass 1: conv1 + BN1 partial stats ----------------
    raw1, st1 = pl.pallas_call(
        conv1_kernel,
        grid=(N,),
        in_specs=[per_n(Cin, HW), full(9, Cout, Cin)],
        out_specs=[per_n(Cout, HW), per_n(Cout, 2)],
        out_shape=[jax.ShapeDtypeStruct((N, Cout, HW), cdt),
                   jax.ShapeDtypeStruct((N, Cout, 2), jnp.float32)],
        scratch_shapes=[pltpu.VMEM((Cin, padw), jnp.float32)],
        compiler_params=cparams,
    )(xflat, w1)

    sc1, sh1 = _bn_scale_shift(st1, p["g1"], p["beta1"], count)

    # ------------ pass 2: BN1+ReLU -> conv2 + BN2 partial stats ------------
    raw2, st2 = pl.pallas_call(
        conv2_kernel,
        grid=(N,),
        in_specs=[per_n(Cout, HW), full(Cout, 1), full(Cout, 1),
                  full(9, Cout, Cout)],
        out_specs=[per_n(Cout, HW), per_n(Cout, 2)],
        out_shape=[jax.ShapeDtypeStruct((N, Cout, HW), cdt),
                   jax.ShapeDtypeStruct((N, Cout, 2), jnp.float32)],
        scratch_shapes=[pltpu.VMEM((Cout, padw), jnp.float32)],
        compiler_params=cparams,
    )(raw1, sc1, sh1, w2)

    sc2, sh2 = _bn_scale_shift(st2, p["g2"], p["beta2"], count)

    # ---------------- pass 3: BN2 + ReLU (lane-dense output) ----------------
    # (input_output_aliases not used: raw2 is bf16 while the module output is f32)
    y2 = pl.pallas_call(
        bn_relu_kernel,
        grid=(N,),
        in_specs=[per_n(Cout, HW), full(Cout, 1), full(Cout, 1)],
        out_specs=per_n(Cout, HW),
        out_shape=jax.ShapeDtypeStruct((N, Cout, HW), jnp.float32),
        compiler_params=cparams,
    )(raw2, sc2, sh2)

    # Contiguous reshape only — no crop, no data movement. Already NCHW.
    return y2.reshape(N, Cout, H, W)


def ref_forward(x, p):
    """Pure-JAX reference matching PyTorch (conv with bias, training-mode BN)."""
    def conv_bn_relu(x, w, b, g, beta):
        y = jax.lax.conv_general_dilated(
            x, w, window_strides=(1, 1), padding=((1, 1), (1, 1)),
            dimension_numbers=("NCHW", "OIHW", "NCHW"))
        y = y + b[None, :, None, None]
        mu = jnp.mean(y, axis=(0, 2, 3), keepdims=True)
        var = jnp.mean((y - mu) ** 2, axis=(0, 2, 3), keepdims=True)
        y = (y - mu) * jax.lax.rsqrt(var + EPS)
        y = y * g[None, :, None, None] + beta[None, :, None, None]
        return jnp.maximum(y, 0.0)

    y = conv_bn_relu(x, p["w1"], p["b1"], p["g1"], p["beta1"])
    return conv_bn_relu(y, p["w2"], p["b2"], p["g2"], p["beta2"])


if __name__ == "__main__":
    key = jax.random.PRNGKey(0)
    ks = jax.random.split(key, 9)

    N, Cin, Cout, H, W = 2, 4, 8, 16, 16
    params = {
        "w1":    0.1 * jax.random.normal(ks[0], (Cout, Cin, 3, 3), jnp.float32),
        "b1":    0.1 * jax.random.normal(ks[1], (Cout,), jnp.float32),
        "g1":    1.0 + 0.1 * jax.random.normal(ks[2], (Cout,), jnp.float32),
        "beta1": 0.1 * jax.random.normal(ks[3], (Cout,), jnp.float32),
        "w2":    0.1 * jax.random.normal(ks[4], (Cout, Cout, 3, 3), jnp.float32),
        "b2":    0.1 * jax.random.normal(ks[5], (Cout,), jnp.float32),
        "g2":    1.0 + 0.1 * jax.random.normal(ks[6], (Cout,), jnp.float32),
        "beta2": 0.1 * jax.random.normal(ks[7], (Cout,), jnp.float32),
    }
    x = jax.random.normal(ks[8], (N, Cin, H, W), jnp.float32)

    ref = jax.block_until_ready(ref_forward(x, params))

    # f32 path: tight check of the kernel logic (layout / masks / BN stats).
    fwd_f32 = jax.jit(functools.partial(double_conv_forward,
                                        compute_dtype=jnp.float32))
    out_f32 = jax.block_until_ready(fwd_f32(x, params))
    assert out_f32.shape == (N, Cout, H, W), out_f32.shape
    err_f32 = float(jnp.max(jnp.abs(out_f32 - ref)))
    assert jnp.allclose(out_f32, ref, atol=5e-4, rtol=5e-4), err_f32

    # bf16 path (default, MXU-native): loose smoke check vs the f32 reference.
    fwd_bf16 = jax.jit(functools.partial(double_conv_forward,
                                         compute_dtype=jnp.bfloat16))
    out_bf16 = jax.block_until_ready(fwd_bf16(x, params))
    assert out_bf16.shape == (N, Cout, H, W), out_bf16.shape
    err_bf16 = float(jnp.max(jnp.abs(out_bf16 - ref)))
    assert err_bf16 < 0.1, err_bf16

    print("KERNEL_OK")
</pallas_src>

<mosaic_0001>
module attributes {stable_mosaic.version = 11 : i64} {
  func.func @conv1_kernel(%arg0: i32, %arg1: memref<1x4x256xf32, #tpu.memory_space<vmem>>, %arg2: memref<9x8x4xf32, #tpu.memory_space<vmem>>, %arg3: memref<1x8x256xf32, #tpu.memory_space<vmem>>, %arg4: memref<1x8x2xf32, #tpu.memory_space<vmem>>, %arg5: memref<4x401xf32, #tpu.memory_space<vmem>>) attributes {dimension_semantics = [#tpu.dimension_semantics<parallel>], iteration_bounds = array<i64: 2>, scalar_prefetch = 0 : i64, scratch_operands = 1 : i64, tpu.core_type = #tpu.core_type<tc>, window_params = [{transform_indices = @transform_0, window_bounds = array<i64: 1, 4, 256>}, {pipeline_mode = #tpu.pipeline_mode<synchronous>, transform_indices = @transform_1, window_bounds = array<i64: 9, 8, 4>}, {transform_indices = @transform_2, window_bounds = array<i64: 1, 8, 256>}, {transform_indices = @transform_3, window_bounds = array<i64: 1, 8, 2>}]} {
    %c0 = arith.constant 0 : index
    %c0_0 = arith.constant 0 : index
    %c0_1 = arith.constant 0 : index
    %0 = vector.load %arg1[%c0, %c0_0, %c0_1] : memref<1x4x256xf32, #tpu.memory_space<vmem>>, vector<1x4x256xf32>
    %1 = vector.shape_cast %0 : vector<1x4x256xf32> to vector<4x256xf32>
    %cst = arith.constant 0.000000e+00 : f32
    %2 = vector.broadcast %cst : f32 to vector<4x128xf32>
    %c0_2 = arith.constant 0 : index
    %c0_3 = arith.constant 0 : index
    %3 = vector.load %arg5[%c0_2, %c0_3] : memref<4x401xf32, #tpu.memory_space<vmem>>, vector<4x128xf32>
    tpu.vector_store %arg5[%c0_2, %c0_3], %2 {strides = array<i32>} : memref<4x401xf32, #tpu.memory_space<vmem>>, vector<4x128xf32>,
    %c0_4 = arith.constant 0 : index
    %c128 = arith.constant 128 : index
    %4 = vector.load %arg5[%c0_4, %c128] : memref<4x401xf32, #tpu.memory_space<vmem>>, vector<4x256xf32>
    tpu.vector_store %arg5[%c0_4, %c128], %1 {strides = array<i32>} : memref<4x401xf32, #tpu.memory_space<vmem>>, vector<4x256xf32>,
    %cst_5 = arith.constant 0.000000e+00 : f32
    %5 = vector.broadcast %cst_5 : f32 to vector<4x17xf32>
    %c0_6 = arith.constant 0 : index
    %c384 = arith.constant 384 : index
    %6 = vector.load %arg5[%c0_6, %c384] : memref<4x401xf32, #tpu.memory_space<vmem>>, vector<4x17xf32>
    tpu.vector_store %arg5[%c0_6, %c384], %5 {strides = array<i32>} : memref<4x401xf32, #tpu.memory_space<vmem>>, vector<4x17xf32>,
    %7 = tpu.iota {dimensions = array<i32: 1>} : vector<1x256xi32>
    %c16_i32 = arith.constant 16 : i32
    %c0_i32 = arith.constant 0 : i32
    %8 = arith.cmpi eq, %c16_i32, %c0_i32 : i32
    %c1_i32 = arith.constant 1 : i32
    %9 = arith.select %8, %c1_i32, %c16_i32 : i32
    %10 = vector.broadcast %9 : i32 to vector<1x256xi32>
    %11 = arith.remsi %7, %10 : vector<1x256xi32>
    %c0_i32_7 = arith.constant 0 : i32
    %12 = vector.broadcast %c0_i32_7 : i32 to vector<1x256xi32>
    %13 = arith.cmpi ne, %11, %12 : vector<1x256xi32>
    %c0_i32_8 = arith.constant 0 : i32
    %14 = vector.broadcast %c0_i32_8 : i32 to vector<1x256xi32>
    %15 = arith.cmpi slt, %11, %14 : vector<1x256xi32>
    %c0_i32_9 = arith.constant 0 : i32
    %16 = arith.cmpi slt, %9, %c0_i32_9 : i32
    %17 = vector.broadcast %16 : i1 to vector<1x256xi1>
    %18 = vector.broadcast %17 : vector<1x256xi1> to vector<1x256xi1>
    %19 = arith.xori %15, %18 : vector<1x256xi1>
    %20 = arith.andi %19, %13 : vector<1x256xi1>
    %21 = vector.broadcast %9 : i32 to vector<1x256xi32>
    %22 = arith.addi %11, %21 : vector<1x256xi32>
    %23 = arith.select %20, %22, %11 : vector<1x256xi1>, vector<1x256xi32>
    %c0_10 = arith.constant 0 : index
    %c112 = arith.constant 112 : index
    %24 = vector.load %arg5[%c0_10, %c112] : memref<4x401xf32, #tpu.memory_space<vmem>>, vector<4x256xf32>
    %c1 = arith.constant 1 : index
    %c0_11 = arith.constant 0 : index
    %c0_12 = arith.constant 0 : index
    %25 = vector.load %arg2[%c1, %c0_11, %c0_12] : memref<9x8x4xf32, #tpu.memory_space<vmem>>, vector<1x8x4xf32>
    %26 = vector.shape_cast %25 : vector<1x8x4xf32> to vector<8x4xf32>
    %cst_13 = arith.constant dense<0.000000e+00> : vector<8x256xf32>
    %27 = tpu.matmul %26, %24, %cst_13 {dimension_numbers = #tpu.dot_dimension_numbers<[1], [0], [0], [1], [0, 0, 1, 1], [], []>} : vector<8x4xf32>, vector<4x256xf32>, vector<8x256xf32> -> vector<8x256xf32>
    %c0_14 = arith.constant 0 : index
    %c128_15 = arith.constant 128 : index
    %28 = vector.load %arg5[%c0_14, %c128_15] : memref<4x401xf32, #tpu.memory_space<vmem>>, vector<4x256xf32>
    %c4 = arith.constant 4 : index
    %c0_16 = arith.constant 0 : index
    %c0_17 = arith.constant 0 : index
    %29 = vector.load %arg2[%c4, %c0_16, %c0_17] : memref<9x8x4xf32, #tpu.memory_space<vmem>>, vector<1x8x4xf32>
    %30 = vector.shape_cast %29 : vector<1x8x4xf32> to vector<8x4xf32>
    %cst_18 = arith.constant dense<0.000000e+00> : vector<8x256xf32>
    %31 = tpu.matmul %30, %28, %cst_18 {dimension_numbers = #tpu.dot_dimension_numbers<[1], [0], [0], [1], [0, 0, 1, 1], [], []>} : vector<8x4xf32>, vector<4x256xf32>, vector<8x256xf32> -> vector<8x256xf32>
    %32 = arith.addf %27, %31 : vector<8x256xf32>
    %c0_19 = arith.constant 0 : index
    %c144 = arith.constant 144 : index
    %33 = vector.load %arg5[%c0_19, %c144] : memref<4x401xf32, #tpu.memory_space<vmem>>, vector<4x256xf32>
    %c7 = arith.constant 7 : index
    %c0_20 = arith.constant 0 : index
    %c0_21 = arith.constant 0 : index
    %34 = vector.load %arg2[%c7, %c0_20, %c0_21] : memref<9x8x4xf32, #tpu.memory_space<vmem>>, vector<1x8x4xf32>
    %35 = vector.shape_cast %34 : vector<1x8x4xf32> to vector<8x4xf32>
    %cst_22 = arith.constant dense<0.000000e+00> : vector<8x256xf32>
    %36 = tpu.matmul %35, %33, %cst_22 {dimension_numbers = #tpu.dot_dimension_numbers<[1], [0], [0], [1], [0, 0, 1, 1], [], []>} : vector<8x4xf32>, vector<4x256xf32>, vector<8x256xf32> -> vector<8x256xf32>
    %37 = arith.addf %32, %36 : vector<8x256xf32>
    %c1_i32_23 = arith.constant 1 : i32
    %38 = vector.broadcast %c1_i32_23 : i32 to vector<1x256xi32>
    %39 = arith.cmpi sge, %23, %38 : vector<1x256xi32>
    %c0_24 = arith.constant 0 : index
    %c111 = arith.constant 111 : index
    %40 = vector.load %arg5[%c0_24, %c111] : memref<4x401xf32, #tpu.memory_space<vmem>>, vector<4x256xf32>
    %c0_25 = arith.constant 0 : index
    %c0_26 = arith.constant 0 : index
    %c0_27 = arith.constant 0 : index
    %41 = vector.load %arg2[%c0_25, %c0_26, %c0_27] : memref<9x8x4xf32, #tpu.memory_space<vmem>>, vector<1x8x4xf32>
    %42 = vector.shape_cast %41 : vector<1x8x4xf32> to vector<8x4xf32>
    %cst_28 = arith.constant dense<0.000000e+00> : vector<8x256xf32>
    %43 = tpu.matmul %42, %40, %cst_28 {dimension_numbers = #tpu.dot_dimension_numbers<[1], [0], [0], [1], [0, 0, 1, 1], [], []>} : vector<8x4xf32>, vector<4x256xf32>, vector<8x256xf32> -> vector<8x256xf32>
    %c0_29 = arith.constant 0 : index
    %c127 = arith.constant 127 : index
    %44 = vector.load %arg5[%c0_29, %c127] : memref<4x401xf32, #tpu.memory_space<vmem>>, vector<4x256xf32>
    %c3 = arith.constant 3 : index
    %c0_30 = arith.constant 0 : index
    %c0_31 = arith.constant 0 : index
    %45 = vector.load %arg2[%c3, %c0_30, %c0_31] : memref<9x8x4xf32, #tpu.memory_space<vmem>>, vector<1x8x4xf32>
    %46 = vector.shape_cast %45 : vector<1x8x4xf32> to vector<8x4xf32>
    %cst_32 = arith.constant dense<0.000000e+00> : vector<8x256xf32>
    %47 = tpu.matmul %46, %44, %cst_32 {dimension_numbers = #tpu.dot_dimension_numbers<[1], [0], [0], [1], [0, 0, 1, 1], [], []>} : vector<8x4xf32>, vector<4x256xf32>, vector<8x256xf32> -> vector<8x256xf32>
    %48 = arith.addf %43, %47 : vector<8x256xf32>
    %c0_33 = arith.constant 0 : index
    %c143 = arith.constant 143 : index
    %49 = vector.load %arg5[%c0_33, %c143] : memref<4x401xf32, #tpu.memory_space<vmem>>, vector<4x256xf32>
    %c6 = arith.constant 6 : index
    %c0_34 = arith.constant 0 : index
    %c0_35 = arith.constant 0 : index
    %50 = vector.load %arg2[%c6, %c0_34, %c0_35] : memref<9x8x4xf32, #tpu.memory_space<vmem>>, vector<1x8x4xf32>
    %51 = vector.shape_cast %50 : vector<1x8x4xf32> to vector<8x4xf32>
    %cst_36 = arith.constant dense<0.000000e+00> : vector<8x256xf32>
    %52 = tpu.matmul %51, %49, %cst_36 {dimension_numbers = #tpu.dot_dimension_numbers<[1], [0], [0], [1], [0, 0, 1, 1], [], []>} : vector<8x4xf32>, vector<4x256xf32>, vector<8x256xf32> -> vector<8x256xf32>
    %53 = arith.addf %48, %52 : vector<8x256xf32>
    %cst_37 = arith.constant 0.000000e+00 : f32
    %54 = vector.shape_cast %39 : vector<1x256xi1> to vector<1x256xi1>
    %55 = vector.broadcast %54 : vector<1x256xi1> to vector<8x256xi1>
    %56 = vector.broadcast %cst_37 : f32 to vector<8x256xf32>
    %57 = arith.select %55, %53, %56 : vector<8x256xi1>, vector<8x256xf32>
    %58 = arith.addf %37, %57 : vector<8x256xf32>
    %c14_i32 = arith.constant 14 : i32
    %59 = vector.broadcast %c14_i32 : i32 to vector<1x256xi32>
    %60 = arith.cmpi sle, %23, %59 : vector<1x256xi32>
    %c0_38 = arith.constant 0 : index
    %c113 = arith.constant 113 : index
    %61 = vector.load %arg5[%c0_38, %c113] : memref<4x401xf32, #tpu.memory_space<vmem>>, vector<4x256xf32>
    %c2 = arith.constant 2 : index
    %c0_39 = arith.constant 0 : index
    %c0_40 = arith.constant 0 : index
    %62 = vector.load %arg2[%c2, %c0_39, %c0_40] : memref<9x8x4xf32, #tpu.memory_space<vmem>>, vector<1x8x4xf32>
    %63 = vector.shape_cast %62 : vector<1x8x4xf32> to vector<8x4xf32>
    %cst_41 = arith.constant dense<0.000000e+00> : vector<8x256xf32>
    %64 = tpu.matmul %63, %61, %cst_41 {dimension_numbers = #tpu.dot_dimension_numbers<[1], [0], [0], [1], [0, 0, 1, 1], [], []>} : vector<8x4xf32>, vector<4x256xf32>, vector<8x256xf32> -> vector<8x256xf32>
    %c0_42 = arith.constant 0 : index
    %c129 = arith.constant 129 : index
    %65 = vector.load %arg5[%c0_42, %c129] : memref<4x401xf32, #tpu.memory_space<vmem>>, vector<4x256xf32>
    %c5 = arith.constant 5 : index
    %c0_43 = arith.constant 0 : index
    %c0_44 = arith.constant 0 : index
    %66 = vector.load %arg2[%c5, %c0_43, %c0_44] : memref<9x8x4xf32, #tpu.memory_space<vmem>>, vector<1x8x4xf32>
    %67 = vector.shape_cast %66 : vector<1x8x4xf32> to vector<8x4xf32>
    %cst_45 = arith.constant dense<0.000000e+00> : vector<8x256xf32>
    %68 = tpu.matmul %67, %65, %cst_45 {dimension_numbers = #tpu.dot_dimension_numbers<[1], [0], [0], [1], [0, 0, 1, 1], [], []>} : vector<8x4xf32>, vector<4x256xf32>, vector<8x256xf32> -> vector<8x256xf32>
    %69 = arith.addf %64, %68 : vector<8x256xf32>
    %c0_46 = arith.constant 0 : index
    %c145 = arith.constant 145 : index
    %70 = vector.load %arg5[%c0_46, %c145] : memref<4x401xf32, #tpu.memory_space<vmem>>, vector<4x256xf32>
    %c8 = arith.constant 8 : index
    %c0_47 = arith.constant 0 : index
    %c0_48 = arith.constant 0 : index
    %71 = vector.load %arg2[%c8, %c0_47, %c0_48] : memref<9x8x4xf32, #tpu.memory_space<vmem>>, vector<1x8x4xf32>
    %72 = vector.shape_cast %71 : vector<1x8x4xf32> to vector<8x4xf32>
    %cst_49 = arith.constant dense<0.000000e+00> : vector<8x256xf32>
    %73 = tpu.matmul %72, %70, %cst_49 {dimension_numbers = #tpu.dot_dimension_numbers<[1], [0], [0], [1], [0, 0, 1, 1], [], []>} : vector<8x4xf32>, vector<4x256xf32>, vector<8x256xf32> -> vector<8x256xf32>
    %74 = arith.addf %69, %73 : vector<8x256xf32>
    %cst_50 = arith.constant 0.000000e+00 : f32
    %75 = vector.shape_cast %60 : vector<1x256xi1> to vector<1x256xi1>
    %76 = vector.broadcast %75 : vector<1x256xi1> to vector<8x256xi1>
    %77 = vector.broadcast %cst_50 : f32 to vector<8x256xf32>
    %78 = arith.select %76, %74, %77 : vector<8x256xi1>, vector<8x256xf32>
    %79 = arith.addf %58, %78 : vector<8x256xf32>
    %c0_51 = arith.constant 0 : index
    %c0_52 = arith.constant 0 : index
    %c0_53 = arith.constant 0 : index
    %80 = vector.load %arg3[%c0_51, %c0_52, %c0_53] : memref<1x8x256xf32, #tpu.memory_space<vmem>>, vector<1x8x256xf32>
    %81 = vector.shape_cast %80 : vector<1x8x256xf32> to vector<8x256xf32>
    %82 = vector.shape_cast %79 : vector<8x256xf32> to vector<1x8x256xf32>
    tpu.vector_store %arg3[%c0_51, %c0_52, %c0_53], %82 {strides = array<i32>} : memref<1x8x256xf32, #tpu.memory_space<vmem>>, vector<1x8x256xf32>,
    %cst_54 = arith.constant dense<0.000000e+00> : vector<8xf32>
    %83 = vector.multi_reduction <add>, %79, %cst_54 [1] : vector<8x256xf32> to vector<8xf32>
    %84 = vector.shape_cast %83 : vector<8xf32> to vector<8x1xf32>
    %85 = arith.mulf %79, %79 : vector<8x256xf32>
    %cst_55 = arith.constant dense<0.000000e+00> : vector<8xf32>
    %86 = vector.multi_reduction <add>, %85, %cst_55 [1] : vector<8x256xf32> to vector<8xf32>
    %87 = vector.shape_cast %86 : vector<8xf32> to vector<8x1xf32>
    %88 = tpu.iota {dimensions = array<i32: 1>} : vector<1x2xi32>
    %c0_i32_56 = arith.constant 0 : i32
    %89 = vector.broadcast %c0_i32_56 : i32 to vector<1x2xi32>
    %90 = arith.cmpi eq, %88, %89 : vector<1x2xi32>
    %91 = vector.shape_cast %90 : vector<1x2xi1> to vector<1x2xi1>
    %92 = vector.broadcast %91 : vector<1x2xi1> to vector<8x2xi1>
    %93 = vector.shape_cast %84 : vector<8x1xf32> to vector<8x1xf32>
    %94 = vector.broadcast %93 : vector<8x1xf32> to vector<8x2xf32>
    %95 = vector.shape_cast %87 : vector<8x1xf32> to vector<8x1xf32>
    %96 = vector.broadcast %95 : vector<8x1xf32> to vector<8x2xf32>
    %97 = arith.select %92, %94, %96 : vector<8x2xi1>, vector<8x2xf32>
    %c0_57 = arith.constant 0 : index
    %c0_58 = arith.constant 0 : index
    %c0_59 = arith.constant 0 : index
    %98 = vector.load %arg4[%c0_57, %c0_58, %c0_59] : memref<1x8x2xf32, #tpu.memory_space<vmem>>, vector<1x8x2xf32>
    %99 = vector.shape_cast %98 : vector<1x8x2xf32> to vector<8x2xf32>
    %100 = vector.shape_cast %97 : vector<8x2xf32> to vector<1x8x2xf32>
    tpu.vector_store %arg4[%c0_57, %c0_58, %c0_59], %100 {strides = array<i32>} : memref<1x8x2xf32, #tpu.memory_space<vmem>>, vector<1x8x2xf32>,
    return
  }
  func.func @transform_0(%arg0: i32) -> (i32, i32, i32) {
    %c0_i32 = arith.constant 0 : i32
    %c0_i32_0 = arith.constant 0 : i32
    %c0_i32_1 = arith.constant 0 : i32
    return %arg0, %c0_i32, %c0_i32_0 : i32, i32, i32
  }
  func.func @transform_1(%arg0: i32) -> (i32, i32, i32) {
    %c0_i32 = arith.constant 0 : i32
    %c0_i32_0 = arith.constant 0 : i32
    %c0_i32_1 = arith.constant 0 : i32
    %c0_i32_2 = arith.constant 0 : i32
    return %c0_i32, %c0_i32_0, %c0_i32_1 : i32, i32, i32
  }
  func.func @transform_2(%arg0: i32) -> (i32, i32, i32) {
    %c0_i32 = arith.constant 0 : i32
    %c0_i32_0 = arith.constant 0 : i32
    %c0_i32_1 = arith.constant 0 : i32
    return %arg0, %c0_i32, %c0_i32_0 : i32, i32, i32
  }
  func.func @transform_3(%arg0: i32) -> (i32, i32, i32) {
    %c0_i32 = arith.constant 0 : i32
    %c0_i32_0 = arith.constant 0 : i32
    %c0_i32_1 = arith.constant 0 : i32
    return %arg0, %c0_i32, %c0_i32_0 : i32, i32, i32
  }
}

module attributes {stable_mosaic.version = 11 : i64} {
  func.func @conv2_kernel(%arg0: i32, %arg1: memref<1x8x256xf32, #tpu.memory_space<vmem>>, %arg2: memref<8x1xf32, #tpu.memory_space<vmem>>, %arg3: memref<8x1xf32, #tpu.memory_space<vmem>>, %arg4: memref<9x8x8xf32, #tpu.memory_space<vmem>>, %arg5: memref<1x8x256xf32, #tpu.memory_space<vmem>>, %arg6: memref<1x8x2xf32, #tpu.memory_space<vmem>>, %arg7: memref<8x401xf32, #tpu.memory_space<vmem>>) attributes {dimension_semantics = [#tpu.dimension_semantics<parallel>], iteration_bounds = array<i64: 2>, scalar_prefetch = 0 : i64, scratch_operands = 1 : i64, tpu.core_type = #tpu.core_type<tc>, window_params = [{transform_indices = @transform_0, window_bounds = array<i64: 1, 8, 256>}, {pipeline_mode = #tpu.pipeline_mode<synchronous>, transform_indices = @transform_1, window_bounds = array<i64: 8, 1>}, {pipeline_mode = #tpu.pipeline_mode<synchronous>, transform_indices = @transform_2, window_bounds = array<i64: 8, 1>}, {pipeline_mode = #tpu.pipeline_mode<synchronous>, transform_indices = @transform_3, window_bounds = array<i64: 9, 8, 8>}, {transform_indices = @transform_4, window_bounds = array<i64: 1, 8, 256>}, {transform_indices = @transform_5, window_bounds = array<i64: 1, 8, 2>}]} {
    %c0 = arith.constant 0 : index
    %c0_0 = arith.constant 0 : index
    %c0_1 = arith.constant 0 : index
    %0 = vector.load %arg1[%c0, %c0_0, %c0_1] : memref<1x8x256xf32, #tpu.memory_space<vmem>>, vector<1x8x256xf32>
    %1 = vector.shape_cast %0 : vector<1x8x256xf32> to vector<8x256xf32>
    %c0_2 = arith.constant 0 : index
    %c0_3 = arith.constant 0 : index
    %2 = vector.load %arg2[%c0_2, %c0_3] : memref<8x1xf32, #tpu.memory_space<vmem>>, vector<8x1xf32>
    %3 = vector.broadcast %2 : vector<8x1xf32> to vector<8x256xf32>
    %4 = arith.mulf %1, %3 : vector<8x256xf32>
    %c0_4 = arith.constant 0 : index
    %c0_5 = arith.constant 0 : index
    %5 = vector.load %arg3[%c0_4, %c0_5] : memref<8x1xf32, #tpu.memory_space<vmem>>, vector<8x1xf32>
    %6 = vector.broadcast %5 : vector<8x1xf32> to vector<8x256xf32>
    %7 = arith.addf %4, %6 : vector<8x256xf32>
    %cst = arith.constant 0.000000e+00 : f32
    %8 = vector.broadcast %cst : f32 to vector<8x256xf32>
    %9 = arith.maximumf %7, %8 : vector<8x256xf32>
    %cst_6 = arith.constant 0.000000e+00 : f32
    %10 = vector.broadcast %cst_6 : f32 to vector<8x128xf32>
    %c0_7 = arith.constant 0 : index
    %c0_8 = arith.constant 0 : index
    %11 = vector.load %arg7[%c0_7, %c0_8] : memref<8x401xf32, #tpu.memory_space<vmem>>, vector<8x128xf32>
    tpu.vector_store %arg7[%c0_7, %c0_8], %10 {strides = array<i32>} : memref<8x401xf32, #tpu.memory_space<vmem>>, vector<8x128xf32>,
    %c0_9 = arith.constant 0 : index
    %c128 = arith.constant 128 : index
    %12 = vector.load %arg7[%c0_9, %c128] : memref<8x401xf32, #tpu.memory_space<vmem>>, vector<8x256xf32>
    tpu.vector_store %arg7[%c0_9, %c128], %9 {strides = array<i32>} : memref<8x401xf32, #tpu.memory_space<vmem>>, vector<8x256xf32>,
    %cst_10 = arith.constant 0.000000e+00 : f32
    %13 = vector.broadcast %cst_10 : f32 to vector<8x17xf32>
    %c0_11 = arith.constant 0 : index
    %c384 = arith.constant 384 : index
    %14 = vector.load %arg7[%c0_11, %c384] : memref<8x401xf32, #tpu.memory_space<vmem>>, vector<8x17xf32>
    tpu.vector_store %arg7[%c0_11, %c384], %13 {strides = array<i32>} : memref<8x401xf32, #tpu.memory_space<vmem>>, vector<8x17xf32>,
    %15 = tpu.iota {dimensions = array<i32: 1>} : vector<1x256xi32>
    %c16_i32 = arith.constant 16 : i32
    %c0_i32 = arith.constant 0 : i32
    %16 = arith.cmpi eq, %c16_i32, %c0_i32 : i32
    %c1_i32 = arith.constant 1 : i32
    %17 = arith.select %16, %c1_i32, %c16_i32 : i32
    %18 = vector.broadcast %17 : i32 to vector<1x256xi32>
    %19 = arith.remsi %15, %18 : vector<1x256xi32>
    %c0_i32_12 = arith.constant 0 : i32
    %20 = vector.broadcast %c0_i32_12 : i32 to vector<1x256xi32>
    %21 = arith.cmpi ne, %19, %20 : vector<1x256xi32>
    %c0_i32_13 = arith.constant 0 : i32
    %22 = vector.broadcast %c0_i32_13 : i32 to vector<1x256xi32>
    %23 = arith.cmpi slt, %19, %22 : vector<1x256xi32>
    %c0_i32_14 = arith.constant 0 : i32
    %24 = arith.cmpi slt, %17, %c0_i32_14 : i32
    %25 = vector.broadcast %24 : i1 to vector<1x256xi1>
    %26 = vector.broadcast %25 : vector<1x256xi1> to vector<1x256xi1>
    %27 = arith.xori %23, %26 : vector<1x256xi1>
    %28 = arith.andi %27, %21 : vector<1x256xi1>
    %29 = vector.broadcast %17 : i32 to vector<1x256xi32>
    %30 = arith.addi %19, %29 : vector<1x256xi32>
    %31 = arith.select %28, %30, %19 : vector<1x256xi1>, vector<1x256xi32>
    %c0_15 = arith.constant 0 : index
    %c112 = arith.constant 112 : index
    %32 = vector.load %arg7[%c0_15, %c112] : memref<8x401xf32, #tpu.memory_space<vmem>>, vector<8x256xf32>
    %c1 = arith.constant 1 : index
    %c0_16 = arith.constant 0 : index
    %c0_17 = arith.constant 0 : index
    %33 = vector.load %arg4[%c1, %c0_16, %c0_17] : memref<9x8x8xf32, #tpu.memory_space<vmem>>, vector<1x8x8xf32>
    %34 = vector.shape_cast %33 : vector<1x8x8xf32> to vector<8x8xf32>
    %cst_18 = arith.constant dense<0.000000e+00> : vector<8x256xf32>
    %35 = tpu.matmul %34, %32, %cst_18 {dimension_numbers = #tpu.dot_dimension_numbers<[1], [0], [0], [1], [0, 0, 1, 1], [], []>} : vector<8x8xf32>, vector<8x256xf32>, vector<8x256xf32> -> vector<8x256xf32>
    %c0_19 = arith.constant 0 : index
    %c128_20 = arith.constant 128 : index
    %36 = vector.load %arg7[%c0_19, %c128_20] : memref<8x401xf32, #tpu.memory_space<vmem>>, vector<8x256xf32>
    %c4 = arith.constant 4 : index
    %c0_21 = arith.constant 0 : index
    %c0_22 = arith.constant 0 : index
    %37 = vector.load %arg4[%c4, %c0_21, %c0_22] : memref<9x8x8xf32, #tpu.memory_space<vmem>>, vector<1x8x8xf32>
    %38 = vector.shape_cast %37 : vector<1x8x8xf32> to vector<8x8xf32>
    %cst_23 = arith.constant dense<0.000000e+00> : vector<8x256xf32>
    %39 = tpu.matmul %38, %36, %cst_23 {dimension_numbers = #tpu.dot_dimension_numbers<[1], [0], [0], [1], [0, 0, 1, 1], [], []>} : vector<8x8xf32>, vector<8x256xf32>, vector<8x256xf32> -> vector<8x256xf32>
    %40 = arith.addf %35, %39 : vector<8x256xf32>
    %c0_24 = arith.constant 0 : index
    %c144 = arith.constant 144 : index
    %41 = vector.load %arg7[%c0_24, %c144] : memref<8x401xf32, #tpu.memory_space<vmem>>, vector<8x256xf32>
    %c7 = arith.constant 7 : index
    %c0_25 = arith.constant 0 : index
    %c0_26 = arith.constant 0 : index
    %42 = vector.load %arg4[%c7, %c0_25, %c0_26] : memref<9x8x8xf32, #tpu.memory_space<vmem>>, vector<1x8x8xf32>
    %43 = vector.shape_cast %42 : vector<1x8x8xf32> to vector<8x8xf32>
    %cst_27 = arith.constant dense<0.000000e+00> : vector<8x256xf32>
    %44 = tpu.matmul %43, %41, %cst_27 {dimension_numbers = #tpu.dot_dimension_numbers<[1], [0], [0], [1], [0, 0, 1, 1], [], []>} : vector<8x8xf32>, vector<8x256xf32>, vector<8x256xf32> -> vector<8x256xf32>
    %45 = arith.addf %40, %44 : vector<8x256xf32>
    %c1_i32_28 = arith.constant 1 : i32
    %46 = vector.broadcast %c1_i32_28 : i32 to vector<1x256xi32>
    %47 = arith.cmpi sge, %31, %46 : vector<1x256xi32>
    %c0_29 = arith.constant 0 : index
    %c111 = arith.constant 111 : index
    %48 = vector.load %arg7[%c0_29, %c111] : memref<8x401xf32, #tpu.memory_space<vmem>>, vector<8x256xf32>
    %c0_30 = arith.constant 0 : index
    %c0_31 = arith.constant 0 : index
    %c0_32 = arith.constant 0 : index
    %49 = vector.load %arg4[%c0_30, %c0_31, %c0_32] : memref<9x8x8xf32, #tpu.memory_space<vmem>>, vector<1x8x8xf32>
    %50 = vector.shape_cast %49 : vector<1x8x8xf32> to vector<8x8xf32>
    %cst_33 = arith.constant dense<0.000000e+00> : vector<8x256xf32>
    %51 = tpu.matmul %50, %48, %cst_33 {dimension_numbers = #tpu.dot_dimension_numbers<[1], [0], [0], [1], [0, 0, 1, 1], [], []>} : vector<8x8xf32>, vector<8x256xf32>, vector<8x256xf32> -> vector<8x256xf32>
    %c0_34 = arith.constant 0 : index
    %c127 = arith.constant 127 : index
    %52 = vector.load %arg7[%c0_34, %c127] : memref<8x401xf32, #tpu.memory_space<vmem>>, vector<8x256xf32>
    %c3 = arith.constant 3 : index
    %c0_35 = arith.constant 0 : index
    %c0_36 = arith.constant 0 : index
    %53 = vector.load %arg4[%c3, %c0_35, %c0_36] : memref<9x8x8xf32, #tpu.memory_space<vmem>>, vector<1x8x8xf32>
    %54 = vector.shape_cast %53 : vector<1x8x8xf32> to vector<8x8xf32>
    %cst_37 = arith.constant dense<0.000000e+00> : vector<8x256xf32>
    %55 = tpu.matmul %54, %52, %cst_37 {dimension_numbers = #tpu.dot_dimension_numbers<[1], [0], [0], [1], [0, 0, 1, 1], [], []>} : vector<8x8xf32>, vector<8x256xf32>, vector<8x256xf32> -> vector<8x256xf32>
    %56 = arith.addf %51, %55 : vector<8x256xf32>
    %c0_38 = arith.constant 0 : index
    %c143 = arith.constant 143 : index
    %57 = vector.load %arg7[%c0_38, %c143] : memref<8x401xf32, #tpu.memory_space<vmem>>, vector<8x256xf32>
    %c6 = arith.constant 6 : index
    %c0_39 = arith.constant 0 : index
    %c0_40 = arith.constant 0 : index
    %58 = vector.load %arg4[%c6, %c0_39, %c0_40] : memref<9x8x8xf32, #tpu.memory_space<vmem>>, vector<1x8x8xf32>
    %59 = vector.shape_cast %58 : vector<1x8x8xf32> to vector<8x8xf32>
    %cst_41 = arith.constant dense<0.000000e+00> : vector<8x256xf32>
    %60 = tpu.matmul %59, %57, %cst_41 {dimension_numbers = #tpu.dot_dimension_numbers<[1], [0], [0], [1], [0, 0, 1, 1], [], []>} : vector<8x8xf32>, vector<8x256xf32>, vector<8x256xf32> -> vector<8x256xf32>
    %61 = arith.addf %56, %60 : vector<8x256xf32>
    %cst_42 = arith.constant 0.000000e+00 : f32
    %62 = vector.shape_cast %47 : vector<1x256xi1> to vector<1x256xi1>
    %63 = vector.broadcast %62 : vector<1x256xi1> to vector<8x256xi1>
    %64 = vector.broadcast %cst_42 : f32 to vector<8x256xf32>
    %65 = arith.select %63, %61, %64 : vector<8x256xi1>, vector<8x256xf32>
    %66 = arith.addf %45, %65 : vector<8x256xf32>
    %c14_i32 = arith.constant 14 : i32
    %67 = vector.broadcast %c14_i32 : i32 to vector<1x256xi32>
    %68 = arith.cmpi sle, %31, %67 : vector<1x256xi32>
    %c0_43 = arith.constant 0 : index
    %c113 = arith.constant 113 : index
    %69 = vector.load %arg7[%c0_43, %c113] : memref<8x401xf32, #tpu.memory_space<vmem>>, vector<8x256xf32>
    %c2 = arith.constant 2 : index
    %c0_44 = arith.constant 0 : index
    %c0_45 = arith.constant 0 : index
    %70 = vector.load %arg4[%c2, %c0_44, %c0_45] : memref<9x8x8xf32, #tpu.memory_space<vmem>>, vector<1x8x8xf32>
    %71 = vector.shape_cast %70 : vector<1x8x8xf32> to vector<8x8xf32>
    %cst_46 = arith.constant dense<0.000000e+00> : vector<8x256xf32>
    %72 = tpu.matmul %71, %69, %cst_46 {dimension_numbers = #tpu.dot_dimension_numbers<[1], [0], [0], [1], [0, 0, 1, 1], [], []>} : vector<8x8xf32>, vector<8x256xf32>, vector<8x256xf32> -> vector<8x256xf32>
    %c0_47 = arith.constant 0 : index
    %c129 = arith.constant 129 : index
    %73 = vector.load %arg7[%c0_47, %c129] : memref<8x401xf32, #tpu.memory_space<vmem>>, vector<8x256xf32>
    %c5 = arith.constant 5 : index
    %c0_48 = arith.constant 0 : index
    %c0_49 = arith.constant 0 : index
    %74 = vector.load %arg4[%c5, %c0_48, %c0_49] : memref<9x8x8xf32, #tpu.memory_space<vmem>>, vector<1x8x8xf32>
    %75 = vector.shape_cast %74 : vector<1x8x8xf32> to vector<8x8xf32>
    %cst_50 = arith.constant dense<0.000000e+00> : vector<8x256xf32>
    %76 = tpu.matmul %75, %73, %cst_50 {dimension_numbers = #tpu.dot_dimension_numbers<[1], [0], [0], [1], [0, 0, 1, 1], [], []>} : vector<8x8xf32>, vector<8x256xf32>, vector<8x256xf32> -> vector<8x256xf32>
    %77 = arith.addf %72, %76 : vector<8x256xf32>
    %c0_51 = arith.constant 0 : index
    %c145 = arith.constant 145 : index
    %78 = vector.load %arg7[%c0_51, %c145] : memref<8x401xf32, #tpu.memory_space<vmem>>, vector<8x256xf32>
    %c8 = arith.constant 8 : index
    %c0_52 = arith.constant 0 : index
    %c0_53 = arith.constant 0 : index
    %79 = vector.load %arg4[%c8, %c0_52, %c0_53] : memref<9x8x8xf32, #tpu.memory_space<vmem>>, vector<1x8x8xf32>
    %80 = vector.shape_cast %79 : vector<1x8x8xf32> to vector<8x8xf32>
    %cst_54 = arith.constant dense<0.000000e+00> : vector<8x256xf32>
    %81 = tpu.matmul %80, %78, %cst_54 {dimension_numbers = #tpu.dot_dimension_numbers<[1], [0], [0], [1], [0, 0, 1, 1], [], []>} : vector<8x8xf32>, vector<8x256xf32>, vector<8x256xf32> -> vector<8x256xf32>
    %82 = arith.addf %77, %81 : vector<8x256xf32>
    %cst_55 = arith.constant 0.000000e+00 : f32
    %83 = vector.shape_cast %68 : vector<1x256xi1> to vector<1x256xi1>
    %84 = vector.broadcast %83 : vector<1x256xi1> to vector<8x256xi1>
    %85 = vector.broadcast %cst_55 : f32 to vector<8x256xf32>
    %86 = arith.select %84, %82, %85 : vector<8x256xi1>, vector<8x256xf32>
    %87 = arith.addf %66, %86 : vector<8x256xf32>
    %c0_56 = arith.constant 0 : index
    %c0_57 = arith.constant 0 : index
    %c0_58 = arith.constant 0 : index
    %88 = vector.load %arg5[%c0_56, %c0_57, %c0_58] : memref<1x8x256xf32, #tpu.memory_space<vmem>>, vector<1x8x256xf32>
    %89 = vector.shape_cast %88 : vector<1x8x256xf32> to vector<8x256xf32>
    %90 = vector.shape_cast %87 : vector<8x256xf32> to vector<1x8x256xf32>
    tpu.vector_store %arg5[%c0_56, %c0_57, %c0_58], %90 {strides = array<i32>} : memref<1x8x256xf32, #tpu.memory_space<vmem>>, vector<1x8x256xf32>,
    %cst_59 = arith.constant dense<0.000000e+00> : vector<8xf32>
    %91 = vector.multi_reduction <add>, %87, %cst_59 [1] : vector<8x256xf32> to vector<8xf32>
    %92 = vector.shape_cast %91 : vector<8xf32> to vector<8x1xf32>
    %93 = arith.mulf %87, %87 : vector<8x256xf32>
    %cst_60 = arith.constant dense<0.000000e+00> : vector<8xf32>
    %94 = vector.multi_reduction <add>, %93, %cst_60 [1] : vector<8x256xf32> to vector<8xf32>
    %95 = vector.shape_cast %94 : vector<8xf32> to vector<8x1xf32>
    %96 = tpu.iota {dimensions = array<i32: 1>} : vector<1x2xi32>
    %c0_i32_61 = arith.constant 0 : i32
    %97 = vector.broadcast %c0_i32_61 : i32 to vector<1x2xi32>
    %98 = arith.cmpi eq, %96, %97 : vector<1x2xi32>
    %99 = vector.shape_cast %98 : vector<1x2xi1> to vector<1x2xi1>
    %100 = vector.broadcast %99 : vector<1x2xi1> to vector<8x2xi1>
    %101 = vector.shape_cast %92 : vector<8x1xf32> to vector<8x1xf32>
    %102 = vector.broadcast %101 : vector<8x1xf32> to vector<8x2xf32>
    %103 = vector.shape_cast %95 : vector<8x1xf32> to vector<8x1xf32>
    %104 = vector.broadcast %103 : vector<8x1xf32> to vector<8x2xf32>
    %105 = arith.select %100, %102, %104 : vector<8x2xi1>, vector<8x2xf32>
    %c0_62 = arith.constant 0 : index
    %c0_63 = arith.constant 0 : index
    %c0_64 = arith.constant 0 : index
    %106 = vector.load %arg6[%c0_62, %c0_63, %c0_64] : memref<1x8x2xf32, #tpu.memory_space<vmem>>, vector<1x8x2xf32>
    %107 = vector.shape_cast %106 : vector<1x8x2xf32> to vector<8x2xf32>
    %108 = vector.shape_cast %105 : vector<8x2xf32> to vector<1x8x2xf32>
    tpu.vector_store %arg6[%c0_62, %c0_63, %c0_64], %108 {strides = array<i32>} : memref<1x8x2xf32, #tpu.memory_space<vmem>>, vector<1x8x2xf32>,
    return
  }
  func.func @transform_0(%arg0: i32) -> (i32, i32, i32) {
    %c0_i32 = arith.constant 0 : i32
    %c0_i32_0 = arith.constant 0 : i32
    %c0_i32_1 = arith.constant 0 : i32
    return %arg0, %c0_i32, %c0_i32_0 : i32, i32, i32
  }
  func.func @transform_1(%arg0: i32) -> (i32, i32) {
    %c0_i32 = arith.constant 0 : i32
    %c0_i32_0 = arith.constant 0 : i32
    %c0_i32_1 = arith.constant 0 : i32
    return %c0_i32, %c0_i32_0 : i32, i32
  }
  func.func @transform_2(%arg0: i32) -> (i32, i32) {
    %c0_i32 = arith.constant 0 : i32
    %c0_i32_0 = arith.constant 0 : i32
    %c0_i32_1 = arith.constant 0 : i32
    return %c0_i32, %c0_i32_0 : i32, i32
  }
  func.func @transform_3(%arg0: i32) -> (i32, i32, i32) {
    %c0_i32 = arith.constant 0 : i32
    %c0_i32_0 = arith.constant 0 : i32
    %c0_i32_1 = arith.constant 0 : i32
    %c0_i32_2 = arith.constant 0 : i32
    return %c0_i32, %c0_i32_0, %c0_i32_1 : i32, i32, i32
  }
  func.func @transform_4(%arg0: i32) -> (i32, i32, i32) {
    %c0_i32 = arith.constant 0 : i32
    %c0_i32_0 = arith.constant 0 : i32
    %c0_i32_1 = arith.constant 0 : i32
    return %arg0, %c0_i32, %c0_i32_0 : i32, i32, i32
  }
  func.func @transform_5(%arg0: i32) -> (i32, i32, i32) {
    %c0_i32 = arith.constant 0 : i32
    %c0_i32_0 = arith.constant 0 : i32
    %c0_i32_1 = arith.constant 0 : i32
    return %arg0, %c0_i32, %c0_i32_0 : i32, i32, i32
  }
}

module attributes {stable_mosaic.version = 11 : i64} {
  func.func @bn_relu_kernel(%arg0: i32, %arg1: memref<1x8x256xf32, #tpu.memory_space<vmem>>, %arg2: memref<8x1xf32, #tpu.memory_space<vmem>>, %arg3: memref<8x1xf32, #tpu.memory_space<vmem>>, %arg4: memref<1x8x256xf32, #tpu.memory_space<vmem>>) attributes {dimension_semantics = [#tpu.dimension_semantics<parallel>], iteration_bounds = array<i64: 2>, scalar_prefetch = 0 : i64, scratch_operands = 0 : i64, tpu.core_type = #tpu.core_type<tc>, window_params = [{transform_indices = @transform_0, window_bounds = array<i64: 1, 8, 256>}, {pipeline_mode = #tpu.pipeline_mode<synchronous>, transform_indices = @transform_1, window_bounds = array<i64: 8, 1>}, {pipeline_mode = #tpu.pipeline_mode<synchronous>, transform_indices = @transform_2, window_bounds = array<i64: 8, 1>}, {transform_indices = @transform_3, window_bounds = array<i64: 1, 8, 256>}]} {
    %c0 = arith.constant 0 : index
    %c0_0 = arith.constant 0 : index
    %c0_1 = arith.constant 0 : index
    %0 = vector.load %arg1[%c0, %c0_0, %c0_1] : memref<1x8x256xf32, #tpu.memory_space<vmem>>, vector<1x8x256xf32>
    %1 = vector.shape_cast %0 : vector<1x8x256xf32> to vector<8x256xf32>
    %c0_2 = arith.constant 0 : index
    %c0_3 = arith.constant 0 : index
    %2 = vector.load %arg2[%c0_2, %c0_3] : memref<8x1xf32, #tpu.memory_space<vmem>>, vector<8x1xf32>
    %3 = vector.broadcast %2 : vector<8x1xf32> to vector<8x256xf32>
    %4 = arith.mulf %1, %3 : vector<8x256xf32>
    %c0_4 = arith.constant 0 : index
    %c0_5 = arith.constant 0 : index
    %5 = vector.load %arg3[%c0_4, %c0_5] : memref<8x1xf32, #tpu.memory_space<vmem>>, vector<8x1xf32>
    %6 = vector.broadcast %5 : vector<8x1xf32> to vector<8x256xf32>
    %7 = arith.addf %4, %6 : vector<8x256xf32>
    %cst = arith.constant 0.000000e+00 : f32
    %8 = vector.broadcast %cst : f32 to vector<8x256xf32>
    %9 = arith.maximumf %7, %8 : vector<8x256xf32>
    %c0_6 = arith.constant 0 : index
    %c0_7 = arith.constant 0 : index
    %c0_8 = arith.constant 0 : index
    %10 = vector.load %arg4[%c0_6, %c0_7, %c0_8] : memref<1x8x256xf32, #tpu.memory_space<vmem>>, vector<1x8x256xf32>
    %11 = vector.shape_cast %10 : vector<1x8x256xf32> to vector<8x256xf32>
    %12 = vector.shape_cast %9 : vector<8x256xf32> to vector<1x8x256xf32>
    tpu.vector_store %arg4[%c0_6, %c0_7, %c0_8], %12 {strides = array<i32>} : memref<1x8x256xf32, #tpu.memory_space<vmem>>, vector<1x8x256xf32>,
    return
  }
  func.func @transform_0(%arg0: i32) -> (i32, i32, i32) {
    %c0_i32 = arith.constant 0 : i32
    %c0_i32_0 = arith.constant 0 : i32
    %c0_i32_1 = arith.constant 0 : i32
    return %arg0, %c0_i32, %c0_i32_0 : i32, i32, i32
  }
  func.func @transform_1(%arg0: i32) -> (i32, i32) {
    %c0_i32 = arith.constant 0 : i32
    %c0_i32_0 = arith.constant 0 : i32
    %c0_i32_1 = arith.constant 0 : i32
    return %c0_i32, %c0_i32_0 : i32, i32
  }
  func.func @transform_2(%arg0: i32) -> (i32, i32) {
    %c0_i32 = arith.constant 0 : i32
    %c0_i32_0 = arith.constant 0 : i32
    %c0_i32_1 = arith.constant 0 : i32
    return %c0_i32, %c0_i32_0 : i32, i32
  }
  func.func @transform_3(%arg0: i32) -> (i32, i32, i32) {
    %c0_i32 = arith.constant 0 : i32
    %c0_i32_0 = arith.constant 0 : i32
    %c0_i32_1 = arith.constant 0 : i32
    return %arg0, %c0_i32, %c0_i32_0 : i32, i32, i32
  }
}

</mosaic_0001>

<llo_original>
// kernel: double_conv_forward.5
$region0: #{double_conv_forward.5}
  #allocation0 [shape = 'u32[]', space=smem, size = 0x4, offset = 0x4, fixed_abs, tag = 'smem constant byte address 0x4 - core index']
  #allocation1 [shape = 'u32[72,128]{1,0:T(1,128)}', space=vmem, size = 0x9000, scoped, tag = 'internal scratch']
  %s0 = inlined_call_operand.vmem [shape: f32[2,8,256], index: 0, kind: input, shape index: {}]
  %s1 = inlined_call_operand.vmem [shape: f32[8,1], index: 1, kind: input, shape index: {}]
  %s2 = inlined_call_operand.vmem [shape: f32[8,1], index: 2, kind: input, shape index: {}]
  %s3 = inlined_call_operand.vmem [shape: f32[2,8,256], index: 3, kind: output, shape index: {}]
  %s4 = sld [smem:[#allocation0]]
  $region45: #{double_conv_forward.5} parent=0
    _
  %s6 = ssub.s32 1, %s4
  %s7 = scalar_select 0, %s6, %s4
  loop: start=0, step=1, limit=4
  $region2: #{double_conv_forward.5} parent=0 // loop_pre_header
    _
  $region3: #{double_conv_forward.5} parent=0 // loop_header
    %s9 = sphi 0, %s13
    %p10 = scmp.ge.s32.totalorder %s9, 4
    %s19 = sphi 0, %s21
    %s22 = sphi 0, %s19
    %s23 = sphi 0, %s22
    %s39 = sphi 0, %s23
    %s43 = sphi 0, %s43
    %s45 = sphi 0, %s43
    %s46 = sphi 0, %s45
    %s60 = sphi 0, %s46
    %s64 = sphi 0, %s64
    %s66 = sphi 0, %s64
    %s67 = sphi 0, %s66
    %s81 = sphi 0, %s67
    %s87 = sphi 0, %s89
    %s90 = sphi 0, %s87
    %s91 = sphi 0, %s90
    %s107 = sphi 0, %s91
  $region4: #{double_conv_forward.5} parent=0 // loop_header_branch
    %12 = sbr.rel (%p10) target = $region8
  $region5: #{double_conv_forward.5} parent=0 // loop_body
    %s14 = ssub.s32 %s9, 1
    %s15 = ssub.s32 %s9, 2
    %s16 = sadd.s32 %s9, 1
    %s17 = ssub.s32 %s9, %s16
    %p18 = scmp.eq.s32.totalorder %s17, 0
    %s20 = sadd.s32 %s19, 1
    %s21 = scalar_select %p18, %s19, %s20
    %p24 = pneg %p18
    %p25 = scmp.eq.s32.totalorder %s9, 1
    %p26 = por %p24, %p25
    %p27 = scmp.ne.s32.totalorder %s19, %s22
    %p28 = scmp.eq.s32.totalorder %s9, 0
    %p29 = por %p27, %p28
    %p30 = scmp.ne.s32.totalorder %s19, %s22
    %p31 = scmp.eq.s32.totalorder %s14, 1
    %p32 = por %p30, %p31
    %p33 = scmp.ne.s32.totalorder %s22, %s23
    %p34 = scmp.eq.s32.totalorder %s14, 0
    %p35 = por %p33, %p34
    %p36 = scmp.ne.s32.totalorder %s22, %s23
    %p37 = scmp.eq.s32.totalorder %s15, 1
    %p38 = por %p36, %p37
    %p40 = scmp.ne.s32.totalorder %s23, %s39
    %p41 = scmp.eq.s32.totalorder %s15, 0
    %p42 = por %p40, %p41
    %s44 = sadd.s32 %s43, 1
    %p47 = scmp.eq.s32.totalorder %s9, 1
    %p48 = scmp.ne.s32.totalorder %s43, %s45
    %p49 = scmp.eq.s32.totalorder %s9, 0
    %p50 = por %p48, %p49
    %p51 = scmp.ne.s32.totalorder %s43, %s45
    %p52 = scmp.eq.s32.totalorder %s14, 1
    %p53 = por %p51, %p52
    %p54 = scmp.ne.s32.totalorder %s45, %s46
    %p55 = scmp.eq.s32.totalorder %s14, 0
    %p56 = por %p54, %p55
    %p57 = scmp.ne.s32.totalorder %s45, %s46
    %p58 = scmp.eq.s32.totalorder %s15, 1
    %p59 = por %p57, %p58
    %p61 = scmp.ne.s32.totalorder %s46, %s60
    %p62 = scmp.eq.s32.totalorder %s15, 0
    %p63 = por %p61, %p62
    %s65 = sadd.s32 %s64, 1
    %p68 = scmp.eq.s32.totalorder %s9, 1
    %p69 = scmp.ne.s32.totalorder %s64, %s66
    %p70 = scmp.eq.s32.totalorder %s9, 0
    %p71 = por %p69, %p70
    %p72 = scmp.ne.s32.totalorder %s64, %s66
    %p73 = scmp.eq.s32.totalorder %s14, 1
    %p74 = por %p72, %p73
    %p75 = scmp.ne.s32.totalorder %s66, %s67
    %p76 = scmp.eq.s32.totalorder %s14, 0
    %p77 = por %p75, %p76
    %p78 = scmp.ne.s32.totalorder %s66, %s67
    %p79 = scmp.eq.s32.totalorder %s15, 1
    %p80 = por %p78, %p79
    %p82 = scmp.ne.s32.totalorder %s67, %s81
    %p83 = scmp.eq.s32.totalorder %s15, 0
    %p84 = por %p82, %p83
    %s85 = ssub.s32 %s9, %s16
    %p86 = scmp.eq.s32.totalorder %s85, 0
    %s88 = sadd.s32 %s87, 1
    %s89 = scalar_select %p86, %s87, %s88
    %p92 = pneg %p86
    %p93 = scmp.eq.s32.totalorder %s9, 1
    %p94 = por %p92, %p93
    %p95 = scmp.ne.s32.totalorder %s87, %s90
    %p96 = scmp.eq.s32.totalorder %s9, 0
    %p97 = por %p95, %p96
    %p98 = scmp.ne.s32.totalorder %s87, %s90
    %p99 = scmp.eq.s32.totalorder %s14, 1
    %p100 = por %p98, %p99
    %p101 = scmp.ne.s32.totalorder %s90, %s91
    %p102 = scmp.eq.s32.totalorder %s14, 0
    %p103 = por %p101, %p102
    %p104 = scmp.ne.s32.totalorder %s90, %s91
    %p105 = scmp.eq.s32.totalorder %s15, 1
    %p106 = por %p104, %p105
    %p108 = scmp.ne.s32.totalorder %s91, %s107
    %p109 = scmp.eq.s32.totalorder %s15, 0
    %p110 = por %p108, %p109
    %p111 = scmp.le.s32.totalorder 1, %s9
    %p112 = scmp.lt.s32.totalorder %s9, 3
    %p113 = pnand %p111, %p112
    %p114 = pneg %p113
    // Predicated region
    $region9: #{double_conv_forward.5} parent=5 // pred_check
      _
    $region10: #{double_conv_forward.5} parent=5 // pred_check_branch
      %116 = sbr.rel (%p113) target = $region12
    $region11: #{double_conv_forward.5} parent=5 // pred_region
      %s117 = ssub.s32 %s9, 1
      // Predicated region
      $region13: #{double_conv_forward.5} parent=11 // pred_check
        %p118 = pneg %p56
      $region14: #{double_conv_forward.5} parent=11 // pred_check_branch
        %120 = sbr.rel (%p118) target = $region16
      $region15: #{double_conv_forward.5} parent=11 // pred_region
        _
      $region16: #{double_conv_forward.5} parent=11 // pred_fallthru
        _
      // Predicated region
      $region17: #{double_conv_forward.5} parent=11 // pred_check
        %p121 = pneg %p77
      $region18: #{double_conv_forward.5} parent=11 // pred_check_branch
        %123 = sbr.rel (%p121) target = $region20
      $region19: #{double_conv_forward.5} parent=11 // pred_region
        _
      $region20: #{double_conv_forward.5} parent=11 // pred_fallthru
        _
    $region12: #{double_conv_forward.5} parent=5 // pred_fallthru
      _
    %p124 = scmp.lt.s32.totalorder %s9, 2
    // Predicated region
    $region21: #{double_conv_forward.5} parent=5 // pred_check
      %p125 = pneg %p124
    $region22: #{double_conv_forward.5} parent=5 // pred_check_branch
      %127 = sbr.rel (%p125) target = $region24
    $region23: #{double_conv_forward.5} parent=5 // pred_region
      // Predicated region
      $region25: #{double_conv_forward.5} parent=23 // pred_check
        %p128 = pneg %p29
      $region26: #{double_conv_forward.5} parent=23 // pred_check_branch
        %130 = sbr.rel (%p128) target = $region28
      $region27: #{double_conv_forward.5} parent=23 // pred_region
        %p131 = scmp.lt.s32.totalorder %s9, 1
        %s132 = scalar_select %p131, %s9, 1
        %s133 = smul.addr %s132, 2
        %s134 = smul.addr %s133, 8
        %s135 = scalar_lea.vmem %s0, %s134
      $region28: #{double_conv_forward.5} parent=23 // pred_fallthru
        _
    $region24: #{double_conv_forward.5} parent=5 // pred_fallthru
      _
    %p136 = scmp.le.s32.totalorder 1, %s9
    %p137 = scmp.lt.s32.totalorder %s9, 3
    %p138 = pnand %p136, %p137
    %p139 = pneg %p138
    // Predicated region
    $region29: #{double_conv_forward.5} parent=5 // pred_check
      _
    $region30: #{double_conv_forward.5} parent=5 // pred_check_branch
      %141 = sbr.rel (%p138) target = $region32
    $region31: #{double_conv_forward.5} parent=5 // pred_region
      %s142 = ssub.s32 %s9, 1
      %p143 = scmp.lt.s32.totalorder %s14, 1
      %s144 = scalar_select %p143, %s14, 1
      %s145 = smul.addr %s144, 2
      %s146 = smul.addr %s145, 8
      %s147 = scalar_lea.vmem %s0, %s146
      %p148 = pneg %p35
      %p149 = pneg %p32
      %p150 = pneg %p56
      %p151 = pneg %p53
      %p152 = pneg %p77
      %p153 = pneg %p74
      %p154 = pneg %p103
      %p155 = pneg %p100
      %p156 = scmp.lt.s32.totalorder %s14, 1
      %s157 = scalar_select %p156, %s14, 1
      %s158 = smul.addr %s157, 2
      %s159 = smul.addr %s158, 8
      %s160 = scalar_lea.vmem %s3, %s159
      %p161 = scmp.lt.s32.totalorder %s14, 1
      %s162 = scalar_select %p161, %s14, 1
      %s163 = smul.addr %s162, 2
      %s164 = smul.addr %s163, 8
      %s165 = scalar_lea.vmem %s0, %s164
      %p166 = scmp.lt.s32.totalorder %s14, 1
      %s167 = scalar_select %p166, %s14, 1
      %s168 = smul.addr %s167, 2
      %s169 = smul.addr %s168, 8
      %s170 = scalar_lea.vmem %s3, %s169
      %v171 = vld [vmem:[%s165] sm:$0xff]
      %v172 = vld [vmem:[%s165 + $0x8] sm:$0xff]
      %v173 = vld [vmem:[%s1] sm:$0xff]
      %175 = vset.pattern.permute.xlu0 0
      %176 = vperm.xlu0 %175, %v173
      %v177 = vpop.permute.xlu0 %176
      %v179 = vmul.f32 %v171, %v177
      %v180 = vmul.f32 %v172, %v177
      %v181 = vld [vmem:[%s2] sm:$0xff]
      %183 = vset.pattern.permute.xlu0 0
      %184 = vperm.xlu0 %183, %v181
      %v185 = vpop.permute.xlu0 %184
      %v187 = vadd.f32 %v179, %v185
      %v188 = vadd.f32 %v180, %v185
      %v189 = vmax.f32 %v187, 0.0
      %v190 = vmax.f32 %v188, 0.0
      %191 = vst [vmem:[%s170] sm:$0xff] %v189
      %192 = vst [vmem:[%s170 + $0x8] sm:$0xff] %v190
      %p193 = scmp.lt.s32.totalorder %s14, 1
      %s194 = scalar_select %p193, %s14, 1
      %s195 = smul.addr %s194, 2
      %s196 = smul.addr %s195, 8
      %s197 = scalar_lea.vmem %s3, %s196
      // Predicated region
      $region33: #{double_conv_forward.5} parent=31 // pred_check
        %p198 = pneg %p100
      $region34: #{double_conv_forward.5} parent=31 // pred_check_branch
        %200 = sbr.rel (%p198) target = $region36
      $region35: #{double_conv_forward.5} parent=31 // pred_region
        _
      $region36: #{double_conv_forward.5} parent=31 // pred_fallthru
        _
    $region32: #{double_conv_forward.5} parent=5 // pred_fallthru
      _
    %p201 = scmp.le.s32.totalorder 2, %s9
    // Predicated region
    $region37: #{double_conv_forward.5} parent=5 // pred_check
      %p202 = pneg %p201
    $region38: #{double_conv_forward.5} parent=5 // pred_check_branch
      %204 = sbr.rel (%p202) target = $region40
    $region39: #{double_conv_forward.5} parent=5 // pred_region
      %s205 = ssub.s32 %s9, 2
      // Predicated region
      $region41: #{double_conv_forward.5} parent=39 // pred_check
        %p206 = pneg %p106
      $region42: #{double_conv_forward.5} parent=39 // pred_check_branch
        %208 = sbr.rel (%p206) target = $region44
      $region43: #{double_conv_forward.5} parent=39 // pred_region
        %p209 = scmp.lt.s32.totalorder %s15, 1
        %s210 = scalar_select %p209, %s15, 1
        %s211 = smul.addr %s210, 2
        %s212 = smul.addr %s211, 8
        %s213 = scalar_lea.vmem %s3, %s212
      $region44: #{double_conv_forward.5} parent=39 // pred_fallthru
        _
    $region40: #{double_conv_forward.5} parent=5 // pred_fallthru
      _
  $region6: #{double_conv_forward.5} parent=0 // loop_footer
    %s13 = sadd.s32 1, %s9
  $region7: #{double_conv_forward.5} parent=0 // loop_footer_branch
    %8 = sbr.rel target = $region3
  $region8: #{double_conv_forward.5} parent=0 // loop_exit
    _

// kernel: double_conv_forward.3
$region0: #{double_conv_forward.3}
  #allocation0 [shape = 'u32[]', space=smem, size = 0x4, offset = 0x4, fixed_abs, tag = 'smem constant byte address 0x4 - core index']
  #allocation1 [shape = 'u32[72,128]{1,0:T(1,128)}', space=vmem, size = 0x9000, scoped, tag = 'internal scratch']
  #allocation2 [shape = 'f32[4,401]{1,0:T(4,128)}', space=vmem, size = 0x2000, scoped, tag = 'scratch operand']
  %s0 = inlined_call_operand.vmem [shape: f32[2,4,256], index: 0, kind: input, shape index: {}]
  %s1 = inlined_call_operand.vmem [shape: f32[9,8,4], index: 1, kind: input, shape index: {}]
  %s2 = inlined_call_operand.vmem [shape: f32[2,8,256], index: 2, kind: output, shape index: {0}]
  %s3 = inlined_call_operand.vmem [shape: f32[2,8,2], index: 3, kind: output, shape index: {1}]
  %4 = xla_tuple %s2, %s3
  %s5 = sld [smem:[#allocation0]]
  $region49: #{double_conv_forward.3} parent=0
    _
  %s7 = ssub.s32 1, %s5
  %s8 = scalar_select 0, %s7, %s5
  loop: start=0, step=1, limit=4
  $region2: #{double_conv_forward.3} parent=0 // loop_pre_header
    _
  $region3: #{double_conv_forward.3} parent=0 // loop_header
    %s10 = sphi 0, %s14
    %p11 = scmp.ge.s32.totalorder %s10, 4
    %s20 = sphi 0, %s22
    %s23 = sphi 0, %s20
    %s24 = sphi 0, %s23
    %s40 = sphi 0, %s24
    %s44 = sphi 0, %s44
    %s46 = sphi 0, %s44
    %s47 = sphi 0, %s46
    %s61 = sphi 0, %s47
    %s67 = sphi 0, %s69
    %s70 = sphi 0, %s67
    %s71 = sphi 0, %s70
    %s87 = sphi 0, %s71
    %s93 = sphi 0, %s95
    %s96 = sphi 0, %s93
    %s97 = sphi 0, %s96
    %s113 = sphi 0, %s97
  $region4: #{double_conv_forward.3} parent=0 // loop_header_branch
    %13 = sbr.rel (%p11) target = $region8
  $region5: #{double_conv_forward.3} parent=0 // loop_body
    %s15 = ssub.s32 %s10, 1
    %s16 = ssub.s32 %s10, 2
    %s17 = sadd.s32 %s10, 1
    %s18 = ssub.s32 %s10, %s17
    %p19 = scmp.eq.s32.totalorder %s18, 0
    %s21 = sadd.s32 %s20, 1
    %s22 = scalar_select %p19, %s20, %s21
    %p25 = pneg %p19
    %p26 = scmp.eq.s32.totalorder %s10, 1
    %p27 = por %p25, %p26
    %p28 = scmp.ne.s32.totalorder %s20, %s23
    %p29 = scmp.eq.s32.totalorder %s10, 0
    %p30 = por %p28, %p29
    %p31 = scmp.ne.s32.totalorder %s20, %s23
    %p32 = scmp.eq.s32.totalorder %s15, 1
    %p33 = por %p31, %p32
    %p34 = scmp.ne.s32.totalorder %s23, %s24
    %p35 = scmp.eq.s32.totalorder %s15, 0
    %p36 = por %p34, %p35
    %p37 = scmp.ne.s32.totalorder %s23, %s24
    %p38 = scmp.eq.s32.totalorder %s16, 1
    %p39 = por %p37, %p38
    %p41 = scmp.ne.s32.totalorder %s24, %s40
    %p42 = scmp.eq.s32.totalorder %s16, 0
    %p43 = por %p41, %p42
    %s45 = sadd.s32 %s44, 1
    %p48 = scmp.eq.s32.totalorder %s10, 1
    %p49 = scmp.ne.s32.totalorder %s44, %s46
    %p50 = scmp.eq.s32.totalorder %s10, 0
    %p51 = por %p49, %p50
    %p52 = scmp.ne.s32.totalorder %s44, %s46
    %p53 = scmp.eq.s32.totalorder %s15, 1
    %p54 = por %p52, %p53
    %p55 = scmp.ne.s32.totalorder %s46, %s47
    %p56 = scmp.eq.s32.totalorder %s15, 0
    %p57 = por %p55, %p56
    %p58 = scmp.ne.s32.totalorder %s46, %s47
    %p59 = scmp.eq.s32.totalorder %s16, 1
    %p60 = por %p58, %p59
    %p62 = scmp.ne.s32.totalorder %s47, %s61
    %p63 = scmp.eq.s32.totalorder %s16, 0
    %p64 = por %p62, %p63
    %s65 = ssub.s32 %s10, %s17
    %p66 = scmp.eq.s32.totalorder %s65, 0
    %s68 = sadd.s32 %s67, 1
    %s69 = scalar_select %p66, %s67, %s68
    %p72 = pneg %p66
    %p73 = scmp.eq.s32.totalorder %s10, 1
    %p74 = por %p72, %p73
    %p75 = scmp.ne.s32.totalorder %s67, %s70
    %p76 = scmp.eq.s32.totalorder %s10, 0
    %p77 = por %p75, %p76
    %p78 = scmp.ne.s32.totalorder %s67, %s70
    %p79 = scmp.eq.s32.totalorder %s15, 1
    %p80 = por %p78, %p79
    %p81 = scmp.ne.s32.totalorder %s70, %s71
    %p82 = scmp.eq.s32.totalorder %s15, 0
    %p83 = por %p81, %p82
    %p84 = scmp.ne.s32.totalorder %s70, %s71
    %p85 = scmp.eq.s32.totalorder %s16, 1
    %p86 = por %p84, %p85
    %p88 = scmp.ne.s32.totalorder %s71, %s87
    %p89 = scmp.eq.s32.totalorder %s16, 0
    %p90 = por %p88, %p89
    %s91 = ssub.s32 %s10, %s17
    %p92 = scmp.eq.s32.totalorder %s91, 0
    %s94 = sadd.s32 %s93, 1
    %s95 = scalar_select %p92, %s93, %s94
    %p98 = pneg %p92
    %p99 = scmp.eq.s32.totalorder %s10, 1
    %p100 = por %p98, %p99
    %p101 = scmp.ne.s32.totalorder %s93, %s96
    %p102 = scmp.eq.s32.totalorder %s10, 0
    %p103 = por %p101, %p102
    %p104 = scmp.ne.s32.totalorder %s93, %s96
    %p105 = scmp.eq.s32.totalorder %s15, 1
    %p106 = por %p104, %p105
    %p107 = scmp.ne.s32.totalorder %s96, %s97
    %p108 = scmp.eq.s32.totalorder %s15, 0
    %p109 = por %p107, %p108
    %p110 = scmp.ne.s32.totalorder %s96, %s97
    %p111 = scmp.eq.s32.totalorder %s16, 1
    %p112 = por %p110, %p111
    %p114 = scmp.ne.s32.totalorder %s97, %s113
    %p115 = scmp.eq.s32.totalorder %s16, 0
    %p116 = por %p114, %p115
    %p117 = scmp.le.s32.totalorder 1, %s10
    %p118 = scmp.lt.s32.totalorder %s10, 3
    %p119 = pnand %p117, %p118
    %p120 = pneg %p119
    // Predicated region
    $region9: #{double_conv_forward.3} parent=5 // pred_check
      _
    $region10: #{double_conv_forward.3} parent=5 // pred_check_branch
      %122 = sbr.rel (%p119) target = $region12
    $region11: #{double_conv_forward.3} parent=5 // pred_region
      %s123 = ssub.s32 %s10, 1
      // Predicated region
      $region13: #{double_conv_forward.3} parent=11 // pred_check
        %p124 = pneg %p57
      $region14: #{double_conv_forward.3} parent=11 // pred_check_branch
        %126 = sbr.rel (%p124) target = $region16
      $region15: #{double_conv_forward.3} parent=11 // pred_region
        _
      $region16: #{double_conv_forward.3} parent=11 // pred_fallthru
        _
    $region12: #{double_conv_forward.3} parent=5 // pred_fallthru
      _
    %p127 = scmp.lt.s32.totalorder %s10, 2
    // Predicated region
    $region17: #{double_conv_forward.3} parent=5 // pred_check
      %p128 = pneg %p127
    $region18: #{double_conv_forward.3} parent=5 // pred_check_branch
      %130 = sbr.rel (%p128) target = $region20
    $region19: #{double_conv_forward.3} parent=5 // pred_region
      // Predicated region
      $region21: #{double_conv_forward.3} parent=19 // pred_check
        %p131 = pneg %p30
      $region22: #{double_conv_forward.3} parent=19 // pred_check_branch
        %133 = sbr.rel (%p131) target = $region24
      $region23: #{double_conv_forward.3} parent=19 // pred_region
        %p134 = scmp.lt.s32.totalorder %s10, 1
        %s135 = scalar_select %p134, %s10, 1
        %s136 = smul.addr %s135, 2
        %s137 = smul.addr %s136, 4
        %s138 = scalar_lea.vmem %s0, %s137
      $region24: #{double_conv_forward.3} parent=19 // pred_fallthru
        _
    $region20: #{double_conv_forward.3} parent=5 // pred_fallthru
      _
    %p139 = scmp.le.s32.totalorder 1, %s10
    %p140 = scmp.lt.s32.totalorder %s10, 3
    %p141 = pnand %p139, %p140
    %p142 = pneg %p141
    // Predicated region
    $region25: #{double_conv_forward.3} parent=5 // pred_check
      _
    $region26: #{double_conv_forward.3} parent=5 // pred_check_branch
      %144 = sbr.rel (%p141) target = $region28
    $region27: #{double_conv_forward.3} parent=5 // pred_region
      %s145 = ssub.s32 %s10, 1
      %p146 = scmp.lt.s32.totalorder %s15, 1
      %s147 = scalar_select %p146, %s15, 1
      %s148 = smul.addr %s147, 2
      %s149 = smul.addr %s148, 4
      %s150 = scalar_lea.vmem %s0, %s149
      %p151 = pneg %p36
      %p152 = pneg %p33
      %p153 = pneg %p57
      %p154 = pneg %p54
      %p155 = pneg %p83
      %p156 = pneg %p80
      %p157 = scmp.lt.s32.totalorder %s15, 1
      %s158 = scalar_select %p157, %s15, 1
      %s159 = smul.addr %s158, 2
      %s160 = smul.addr %s159, 8
      %s161 = scalar_lea.vmem %s2, %s160
      %p162 = pneg %p109
      %p163 = pneg %p106
      %p164 = scmp.lt.s32.totalorder %s15, 1
      %s165 = scalar_select %p164, %s15, 1
      %s166 = smul.addr %s165, 8
      %s167 = scalar_lea.vmem %s3, %s166
      %p168 = scmp.lt.s32.totalorder %s15, 1
      %s169 = scalar_select %p168, %s15, 1
      %s170 = smul.addr %s169, 2
      %s171 = smul.addr %s170, 4
      %s172 = scalar_lea.vmem %s0, %s171
      %p173 = scmp.lt.s32.totalorder %s15, 1
      %s174 = scalar_select %p173, %s15, 1
      %s175 = smul.addr %s174, 2
      %s176 = smul.addr %s175, 8
      %s177 = scalar_lea.vmem %s2, %s176
      %p178 = scmp.lt.s32.totalorder %s15, 1
      %s179 = scalar_select %p178, %s15, 1
      %s180 = smul.addr %s179, 8
      %s181 = scalar_lea.vmem %s3, %s180
      %v182 = vld [vmem:[%s172] sm:$0xff]
      %183 = vst [vmem:[#allocation2] sm:$0xf] 0.0
      %184 = vst [vmem:[#allocation2 + $0x4] sm:$0xff] %v182
      %vm185 = vcmask 134144
      %186 = vst.msk [vmem:[#allocation2 + $0xc] sm:$0xf] %vm185, 0.0
      %v187 = vlaneseq
      %v188 = vand.u32 %v187, 127
      %v189 = vadd.s32 %v188, 128
      %vm190 = vcmp.lt.s32.totalorder %v188, 0
      %v191 = vsub.s32 0, %v188
      %v192 = vsel %vm190, %v191, %v188
      %v193 = vshrl.u32 %v192, 4
      %v194 = vand.u32 %v192, 15
      %v195 = vsub.s32 0, %v194
      %v196 = vsel %vm190, %v195, %v194
      %vm197 = vcmp.lt.s32.totalorder %v189, 0
      %v198 = vsub.s32 0, %v189
      %v199 = vsel %vm197, %v198, %v189
      %v200 = vshrl.u32 %v199, 4
      %v201 = vand.u32 %v199, 15
      %v202 = vsub.s32 0, %v201
      %v203 = vsel %vm197, %v202, %v201
      %vm204 = vcmp.ne.s32.totalorder %v196, 0
      %vm205 = vcmp.ne.s32.totalorder %v203, 0
      %vm206 = vcmp.lt.s32.totalorder %v196, 0
      %vm207 = vcmp.lt.s32.totalorder %v203, 0
      %vm208 = vmand %vm206, %vm204
      %vm209 = vmand %vm207, %vm205
      %v210 = vadd.s32 %v196, 16
      %v211 = vadd.s32 %v203, 16
      %v212 = vsel %vm208, %v210, %v196
      %v213 = vsel %vm209, %v211, %v203
      %v214 = vld [vmem:[#allocation2] sm:$0xff]
      %v215 = vld [vmem:[#allocation2 + $0x8] sm:$0xf]
      %s216 = scalar_lea.vmem %s1, 8
      %v217 = vld [vmem:[%s216] sm:$0xff]
      %v218 = vld [vmem:[#allocation2 + $0x4] sm:$0xff]
      %s219 = scalar_lea.vmem %s1, 32
      %v220 = vld [vmem:[%s219] sm:$0xff]
      %222 = vst [vmem:[#allocation1] ss:$2 sm:$0xff] %v218
      %v223 = vld.sshfl [vmem:[#allocation1] sm:$0xff pattern:$0x75316420]
      %v224 = vld.sshfl [vmem:[#allocation1 + $0x8] sm:$0xff pattern:$0x75316420]
      %vm225 = vcmask 31744
      %v227 = vsel %vm225, %v220, 0
      %vm229 = vcmask 1043456
      %v230 = vsel %vm229, %v223, 0
      %v232 = vsel %vm229, %v224, 0
      %234 = vmatpush.msra.mxu0 0.0
      %235 = vmatpush.msra.mxu0 0.0
      %236 = vmatpush.msra.mxu0 0.0
      %237 = vmatpush.msra.mxu0 0.0
      %238 = vmatpush.msra.mxu0 0.0
      %239 = vmatpush.msra.mxu0 0.0
      %240 = vmatpush.msra.mxu0 0.0
      %241 = vmatpush.msra.mxu0 0.0
      %242 = vmatpush.msra.mxu0 0.0
      %243 = vmatpush.msra.mxu0 0.0
      %244 = vmatpush.msra.mxu0 0.0
      %245 = vmatpush.msra.mxu0 0.0
      %246 = vmatpush.msra.mxu0 0.0
      %247 = vmatpush.msra.mxu0 0.0
      %248 = vmatpush.msra.mxu0 0.0
      %249 = vmatpush.msra.mxu0 %v230
      %250 = vmatmul.f32.gmra.mxu0 %v227
      %v251 = vpop.f32.mrf.mxu0
      %v252 = vadd.f32 0.0, %v251
      %253 = vdwg.mxu0
      %254 = vmatpush.msra.mxu0 0.0
      %255 = vmatpush.msra.mxu0 0.0
      %256 = vmatpush.msra.mxu0 0.0
      %257 = vmatpush.msra.mxu0 0.0
      %258 = vmatpush.msra.mxu0 0.0
      %259 = vmatpush.msra.mxu0 0.0
      %260 = vmatpush.msra.mxu0 0.0
      %261 = vmatpush.msra.mxu0 0.0
      %262 = vmatpush.msra.mxu0 0.0
      %263 = vmatpush.msra.mxu0 0.0
      %264 = vmatpush.msra.mxu0 0.0
      %265 = vmatpush.msra.mxu0 0.0
      %266 = vmatpush.msra.mxu0 0.0
      %267 = vmatpush.msra.mxu0 0.0
      %268 = vmatpush.msra.mxu0 0.0
      %269 = vmatpush.msra.mxu0 %v232
      %270 = vmatmul.f32.gmra.mxu0 %v227
      %v271 = vpop.f32.mrf.mxu0
      %v272 = vadd.f32 0.0, %v271
      %273 = vdwg.mxu0
      %276 = vst [vmem:[#allocation1] ss:$2 sm:$0xff] %v214
      %s277 = scalar_lea.vmem [#allocation1], 16
      %278 = vst [vmem:[%s277] ss:$2 sm:$0xff] %v215
      %v279 = vld.sshfl [vmem:[#allocation1] sm:$0xff pattern:$0x75316420]
      %v280 = vld.sshfl [vmem:[#allocation1 + $0x8] sm:$0xff pattern:$0x75316420]
      %v281 = vld.sshfl [vmem:[#allocation1 + $0x10] sm:$0xff pattern:$0x75316420]
      %282 = vrot.lane.b32.xlu0 %v279, 16
      %v283 = vpop.permute.xlu0 %282
      %284 = vrot.lane.b32.xlu0 %v280, 16
      %v285 = vpop.permute.xlu0 %284
      %286 = vrot.lane.b32.xlu0 %v281, 16
      %v287 = vpop.permute.xlu0 %286
      %vm288 = vcmask 130048
      %v289 = vsel %vm288, %v283, %v285
      %v290 = vsel %vm288, %v285, %v287
      %v292 = vsel %vm225, %v217, 0
      %v294 = vsel %vm229, %v289, 0
      %v296 = vsel %vm229, %v290, 0
      %298 = vmatpush.msra.mxu0 0.0
      %299 = vmatpush.msra.mxu0 0.0
      %300 = vmatpush.msra.mxu0 0.0
      %301 = vmatpush.msra.mxu0 0.0
      %302 = vmatpush.msra.mxu0 0.0
      %303 = vmatpush.msra.mxu0 0.0
      %304 = vmatpush.msra.mxu0 0.0
      %305 = vmatpush.msra.mxu0 0.0
      %306 = vmatpush.msra.mxu0 0.0
      %307 = vmatpush.msra.mxu0 0.0
      %308 = vmatpush.msra.mxu0 0.0
      %309 = vmatpush.msra.mxu0 0.0
      %310 = vmatpush.msra.mxu0 0.0
      %311 = vmatpush.msra.mxu0 0.0
      %312 = vmatpush.msra.mxu0 0.0
      %313 = vmatpush.msra.mxu0 %v294
      %314 = vmatmul.f32.gmra.mxu0 %v292
      %v315 = vpop.f32.mrf.mxu0
      %v316 = vadd.f32 %v252, %v315
      %317 = vdwg.mxu0
      %318 = vmatpush.msra.mxu0 0.0
      %319 = vmatpush.msra.mxu0 0.0
      %320 = vmatpush.msra.mxu0 0.0
      %321 = vmatpush.msra.mxu0 0.0
      %322 = vmatpush.msra.mxu0 0.0
      %323 = vmatpush.msra.mxu0 0.0
      %324 = vmatpush.msra.mxu0 0.0
      %325 = vmatpush.msra.mxu0 0.0
      %326 = vmatpush.msra.mxu0 0.0
      %327 = vmatpush.msra.mxu0 0.0
      %328 = vmatpush.msra.mxu0 0.0
      %329 = vmatpush.msra.mxu0 0.0
      %330 = vmatpush.msra.mxu0 0.0
      %331 = vmatpush.msra.mxu0 0.0
      %332 = vmatpush.msra.mxu0 0.0
      %333 = vmatpush.msra.mxu0 %v296
      %334 = vmatmul.f32.gmra.mxu0 %v292
      %v335 = vpop.f32.mrf.mxu0
      %v336 = vadd.f32 %v272, %v335
      %337 = vdwg.mxu0
      %v338 = vld [vmem:[#allocation2 + $0x4] sm:$0xff]
      %v339 = vld [vmem:[#allocation2 + $0xc] sm:$0xf]
      %s340 = scalar_lea.vmem %s1, 56
      %v341 = vld [vmem:[%s340] sm:$0xff]
      %344 = vst [vmem:[#allocation1] ss:$2 sm:$0xff] %v338
      %s345 = scalar_lea.vmem [#allocation1], 16
      %346 = vst [vmem:[%s345] ss:$2 sm:$0xff] %v339
      %v347 = vld.sshfl [vmem:[#allocation1] sm:$0xff pattern:$0x75316420]
      %v348 = vld.sshfl [vmem:[#allocation1 + $0x8] sm:$0xff pattern:$0x75316420]
      %v349 = vld.sshfl [vmem:[#allocation1 + $0x10] sm:$0xff pattern:$0x75316420]
      %350 = vrot.lane.b32.xlu0 %v347, 112
      %v351 = vpop.permute.xlu0 %350
      %352 = vrot.lane.b32.xlu0 %v348, 112
      %v353 = vpop.permute.xlu0 %352
      %354 = vrot.lane.b32.xlu0 %v349, 112
      %v355 = vpop.permute.xlu0 %354
      %vm356 = vcmask 916480
      %v357 = vsel %vm356, %v351, %v353
      %v358 = vsel %vm356, %v353, %v355
      %v360 = vsel %vm225, %v341, 0
      %v362 = vsel %vm229, %v357, 0
      %v364 = vsel %vm229, %v358, 0
      %366 = vmatpush.msra.mxu0 0.0
      %367 = vmatpush.msra.mxu0 0.0
      %368 = vmatpush.msra.mxu0 0.0
      %369 = vmatpush.msra.mxu0 0.0
      %370 = vmatpush.msra.mxu0 0.0
      %371 = vmatpush.msra.mxu0 0.0
      %372 = vmatpush.msra.mxu0 0.0
      %373 = vmatpush.msra.mxu0 0.0
      %374 = vmatpush.msra.mxu0 0.0
      %375 = vmatpush.msra.mxu0 0.0
      %376 = vmatpush.msra.mxu0 0.0
      %377 = vmatpush.msra.mxu0 0.0
      %378 = vmatpush.msra.mxu0 0.0
      %379 = vmatpush.msra.mxu0 0.0
      %380 = vmatpush.msra.mxu0 0.0
      %381 = vmatpush.msra.mxu0 %v362
      %382 = vmatmul.f32.gmra.mxu0 %v360
      %v383 = vpop.f32.mrf.mxu0
      %v384 = vadd.f32 0.0, %v383
      %385 = vdwg.mxu0
      %386 = vmatpush.msra.mxu0 0.0
      %387 = vmatpush.msra.mxu0 0.0
      %388 = vmatpush.msra.mxu0 0.0
      %389 = vmatpush.msra.mxu0 0.0
      %390 = vmatpush.msra.mxu0 0.0
      %391 = vmatpush.msra.mxu0 0.0
      %392 = vmatpush.msra.mxu0 0.0
      %393 = vmatpush.msra.mxu0 0.0
      %394 = vmatpush.msra.mxu0 0.0
      %395 = vmatpush.msra.mxu0 0.0
      %396 = vmatpush.msra.mxu0 0.0
      %397 = vmatpush.msra.mxu0 0.0
      %398 = vmatpush.msra.mxu0 0.0
      %399 = vmatpush.msra.mxu0 0.0
      %400 = vmatpush.msra.mxu0 0.0
      %401 = vmatpush.msra.mxu0 %v364
      %402 = vmatmul.f32.gmra.mxu0 %v360
      %v403 = vpop.f32.mrf.mxu0
      %v404 = vadd.f32 0.0, %v403
      %405 = vdwg.mxu0
      %v406 = vadd.f32 %v316, %v384
      %v407 = vadd.f32 %v336, %v404
      %vm408 = vcmp.ge.s32.totalorder %v212, 1
      %vm409 = vcmp.ge.s32.totalorder %v213, 1
      %v410 = vld [vmem:[#allocation2] sm:$0xff]
      %v411 = vld [vmem:[#allocation2 + $0x8] sm:$0xf]
      %v412 = vld [vmem:[%s1] sm:$0xff]
      %s413 = scalar_lea.vmem %s1, 24
      %v414 = vld [vmem:[%s413] sm:$0xff]
      %417 = vst [vmem:[#allocation1] ss:$2 sm:$0xff] %v410
      %s418 = scalar_lea.vmem [#allocation1], 16
      %419 = vst [vmem:[%s418] ss:$2 sm:$0xff] %v411
      %v420 = vld.sshfl [vmem:[#allocation1] sm:$0xff pattern:$0x75316420]
      %v421 = vld.sshfl [vmem:[#allocation1 + $0x8] sm:$0xff pattern:$0x75316420]
      %v422 = vld.sshfl [vmem:[#allocation1 + $0x10] sm:$0xff pattern:$0x75316420]
      %423 = vrot.lane.b32.xlu0 %v420, 1
      %v424 = vpop.permute.xlu0 %423
      %425 = vrot.lane.b32.xlu0 %v421, 1
      %v426 = vpop.permute.xlu0 %425
      %427 = vrot.lane.b32.xlu0 %v422, 1
      %v428 = vpop.permute.xlu0 %427
      %vm429 = vcmask 7168
      %v430 = vsel %vm429, %v424, %v426
      %v431 = vsel %vm429, %v426, %v428
      %v433 = vsel %vm225, %v414, 0
      %v435 = vsel %vm229, %v430, 0
      %v437 = vsel %vm229, %v431, 0
      %439 = vmatpush.msra.mxu0 0.0
      %440 = vmatpush.msra.mxu0 0.0
      %441 = vmatpush.msra.mxu0 0.0
      %442 = vmatpush.msra.mxu0 0.0
      %443 = vmatpush.msra.mxu0 0.0
      %444 = vmatpush.msra.mxu0 0.0
      %445 = vmatpush.msra.mxu0 0.0
      %446 = vmatpush.msra.mxu0 0.0
      %447 = vmatpush.msra.mxu0 0.0
      %448 = vmatpush.msra.mxu0 0.0
      %449 = vmatpush.msra.mxu0 0.0
      %450 = vmatpush.msra.mxu0 0.0
      %451 = vmatpush.msra.mxu0 0.0
      %452 = vmatpush.msra.mxu0 0.0
      %453 = vmatpush.msra.mxu0 0.0
      %454 = vmatpush.msra.mxu0 %v435
      %455 = vmatmul.f32.gmra.mxu0 %v433
      %v456 = vpop.f32.mrf.mxu0
      %v457 = vadd.f32 0.0, %v456
      %458 = vdwg.mxu0
      %459 = vmatpush.msra.mxu0 0.0
      %460 = vmatpush.msra.mxu0 0.0
      %461 = vmatpush.msra.mxu0 0.0
      %462 = vmatpush.msra.mxu0 0.0
      %463 = vmatpush.msra.mxu0 0.0
      %464 = vmatpush.msra.mxu0 0.0
      %465 = vmatpush.msra.mxu0 0.0
      %466 = vmatpush.msra.mxu0 0.0
      %467 = vmatpush.msra.mxu0 0.0
      %468 = vmatpush.msra.mxu0 0.0
      %469 = vmatpush.msra.mxu0 0.0
      %470 = vmatpush.msra.mxu0 0.0
      %471 = vmatpush.msra.mxu0 0.0
      %472 = vmatpush.msra.mxu0 0.0
      %473 = vmatpush.msra.mxu0 0.0
      %474 = vmatpush.msra.mxu0 %v437
      %475 = vmatmul.f32.gmra.mxu0 %v433
      %v476 = vpop.f32.mrf.mxu0
      %v477 = vadd.f32 0.0, %v476
      %478 = vdwg.mxu0
      %479 = vst [vmem:[#allocation1] ss:$2 sm:$0xff] %v410
      %s480 = scalar_lea.vmem [#allocation1], 16
      %481 = vst [vmem:[%s480] ss:$2 sm:$0xff] %v411
      %v482 = vld.sshfl [vmem:[#allocation1] sm:$0xff pattern:$0x75316420]
      %v483 = vld.sshfl [vmem:[#allocation1 + $0x8] sm:$0xff pattern:$0x75316420]
      %v484 = vld.sshfl [vmem:[#allocation1 + $0x10] sm:$0xff pattern:$0x75316420]
      %485 = vrot.lane.b32.xlu0 %v482, 17
      %v486 = vpop.permute.xlu0 %485
      %487 = vrot.lane.b32.xlu0 %v483, 17
      %v488 = vpop.permute.xlu0 %487
      %489 = vrot.lane.b32.xlu0 %v484, 17
      %v490 = vpop.permute.xlu0 %489
      %vm491 = vcmask 138240
      %v492 = vsel %vm491, %v486, %v488
      %v493 = vsel %vm491, %v488, %v490
      %v495 = vsel %vm225, %v412, 0
      %v497 = vsel %vm229, %v492, 0
      %v499 = vsel %vm229, %v493, 0
      %501 = vmatpush.msra.mxu0 0.0
      %502 = vmatpush.msra.mxu0 0.0
      %503 = vmatpush.msra.mxu0 0.0
      %504 = vmatpush.msra.mxu0 0.0
      %505 = vmatpush.msra.mxu0 0.0
      %506 = vmatpush.msra.mxu0 0.0
      %507 = vmatpush.msra.mxu0 0.0
      %508 = vmatpush.msra.mxu0 0.0
      %509 = vmatpush.msra.mxu0 0.0
      %510 = vmatpush.msra.mxu0 0.0
      %511 = vmatpush.msra.mxu0 0.0
      %512 = vmatpush.msra.mxu0 0.0
      %513 = vmatpush.msra.mxu0 0.0
      %514 = vmatpush.msra.mxu0 0.0
      %515 = vmatpush.msra.mxu0 0.0
      %516 = vmatpush.msra.mxu0 %v497
      %517 = vmatmul.f32.gmra.mxu0 %v495
      %v518 = vpop.f32.mrf.mxu0
      %v519 = vadd.f32 %v457, %v518
      %520 = vdwg.mxu0
      %521 = vmatpush.msra.mxu0 0.0
      %522 = vmatpush.msra.mxu0 0.0
      %523 = vmatpush.msra.mxu0 0.0
      %524 = vmatpush.msra.mxu0 0.0
      %525 = vmatpush.msra.mxu0 0.0
      %526 = vmatpush.msra.mxu0 0.0
      %527 = vmatpush.msra.mxu0 0.0
      %528 = vmatpush.msra.mxu0 0.0
      %529 = vmatpush.msra.mxu0 0.0
      %530 = vmatpush.msra.mxu0 0.0
      %531 = vmatpush.msra.mxu0 0.0
      %532 = vmatpush.msra.mxu0 0.0
      %533 = vmatpush.msra.mxu0 0.0
      %534 = vmatpush.msra.mxu0 0.0
      %535 = vmatpush.msra.mxu0 0.0
      %536 = vmatpush.msra.mxu0 %v499
      %537 = vmatmul.f32.gmra.mxu0 %v495
      %v538 = vpop.f32.mrf.mxu0
      %v539 = vadd.f32 %v477, %v538
      %540 = vdwg.mxu0
      %v541 = vld [vmem:[#allocation2 + $0x4] sm:$0xff]
      %v542 = vld [vmem:[#allocation2 + $0xc] sm:$0xf]
      %s543 = scalar_lea.vmem %s1, 48
      %v544 = vld [vmem:[%s543] sm:$0xff]
      %547 = vst [vmem:[#allocation1] ss:$2 sm:$0xff] %v541
      %s548 = scalar_lea.vmem [#allocation1], 16
      %549 = vst [vmem:[%s548] ss:$2 sm:$0xff] %v542
      %v550 = vld.sshfl [vmem:[#allocation1] sm:$0xff pattern:$0x75316420]
      %v551 = vld.sshfl [vmem:[#allocation1 + $0x8] sm:$0xff pattern:$0x75316420]
      %v552 = vld.sshfl [vmem:[#allocation1 + $0x10] sm:$0xff pattern:$0x75316420]
      %553 = vrot.lane.b32.xlu0 %v550, 113
      %v554 = vpop.permute.xlu0 %553
      %555 = vrot.lane.b32.xlu0 %v551, 113
      %v556 = vpop.permute.xlu0 %555
      %557 = vrot.lane.b32.xlu0 %v552, 113
      %v558 = vpop.permute.xlu0 %557
      %vm559 = vcmask 924672
      %v560 = vsel %vm559, %v554, %v556
      %v561 = vsel %vm559, %v556, %v558
      %v563 = vsel %vm225, %v544, 0
      %v565 = vsel %vm229, %v560, 0
      %v567 = vsel %vm229, %v561, 0
      %569 = vmatpush.msra.mxu0 0.0
      %570 = vmatpush.msra.mxu0 0.0
      %571 = vmatpush.msra.mxu0 0.0
      %572 = vmatpush.msra.mxu0 0.0
      %573 = vmatpush.msra.mxu0 0.0
      %574 = vmatpush.msra.mxu0 0.0
      %575 = vmatpush.msra.mxu0 0.0
      %576 = vmatpush.msra.mxu0 0.0
      %577 = vmatpush.msra.mxu0 0.0
      %578 = vmatpush.msra.mxu0 0.0
      %579 = vmatpush.msra.mxu0 0.0
      %580 = vmatpush.msra.mxu0 0.0
      %581 = vmatpush.msra.mxu0 0.0
      %582 = vmatpush.msra.mxu0 0.0
      %583 = vmatpush.msra.mxu0 0.0
      %584 = vmatpush.msra.mxu0 %v565
      %585 = vmatmul.f32.gmra.mxu0 %v563
      %v586 = vpop.f32.mrf.mxu0
      %v587 = vadd.f32 0.0, %v586
      %588 = vdwg.mxu0
      %589 = vmatpush.msra.mxu0 0.0
      %590 = vmatpush.msra.mxu0 0.0
      %591 = vmatpush.msra.mxu0 0.0
      %592 = vmatpush.msra.mxu0 0.0
      %593 = vmatpush.msra.mxu0 0.0
      %594 = vmatpush.msra.mxu0 0.0
      %595 = vmatpush.msra.mxu0 0.0
      %596 = vmatpush.msra.mxu0 0.0
      %597 = vmatpush.msra.mxu0 0.0
      %598 = vmatpush.msra.mxu0 0.0
      %599 = vmatpush.msra.mxu0 0.0
      %600 = vmatpush.msra.mxu0 0.0
      %601 = vmatpush.msra.mxu0 0.0
      %602 = vmatpush.msra.mxu0 0.0
      %603 = vmatpush.msra.mxu0 0.0
      %604 = vmatpush.msra.mxu0 %v567
      %605 = vmatmul.f32.gmra.mxu0 %v563
      %v606 = vpop.f32.mrf.mxu0
      %v607 = vadd.f32 0.0, %v606
      %608 = vdwg.mxu0
      %v609 = vadd.f32 %v519, %v587
      %v610 = vadd.f32 %v539, %v607
      %v611 = vsel %vm408, 1, 0
      %v612 = vsel %vm409, 1, 0
      %vm613 = vcmp.eq.s32.totalorder %v611, 1
      %vm614 = vcmp.eq.s32.totalorder %v612, 1
      %v615 = vsel %vm613, %v609, 0.0
      %v616 = vsel %vm614, %v610, 0.0
      %v617 = vadd.f32 %v406, %v615
      %v618 = vadd.f32 %v407, %v616
      %vm619 = vcmp.le.s32.totalorder %v212, 14
      %vm620 = vcmp.le.s32.totalorder %v213, 14
      %v621 = vld [vmem:[#allocation2] sm:$0xff]
      %v622 = vld [vmem:[#allocation2 + $0x8] sm:$0xf]
      %s623 = scalar_lea.vmem %s1, 16
      %v624 = vld [vmem:[%s623] sm:$0xff]
      %v625 = vld [vmem:[#allocation2 + $0x4] sm:$0xff]
      %v626 = vld [vmem:[#allocation2 + $0xc] sm:$0xf]
      %s627 = scalar_lea.vmem %s1, 40
      %v628 = vld [vmem:[%s627] sm:$0xff]
      %631 = vst [vmem:[#allocation1] ss:$2 sm:$0xff] %v625
      %s632 = scalar_lea.vmem [#allocation1], 16
      %633 = vst [vmem:[%s632] ss:$2 sm:$0xff] %v626
      %v634 = vld.sshfl [vmem:[#allocation1] sm:$0xff pattern:$0x75316420]
      %v635 = vld.sshfl [vmem:[#allocation1 + $0x8] sm:$0xff pattern:$0x75316420]
      %v636 = vld.sshfl [vmem:[#allocation1 + $0x10] sm:$0xff pattern:$0x75316420]
      %637 = vrot.lane.b32.xlu0 %v634, 127
      %v638 = vpop.permute.xlu0 %637
      %639 = vrot.lane.b32.xlu0 %v635, 127
      %v640 = vpop.permute.xlu0 %639
      %641 = vrot.lane.b32.xlu0 %v636, 127
      %v642 = vpop.permute.xlu0 %641
      %vm643 = vcmask 1039360
      %v644 = vsel %vm643, %v638, %v640
      %v645 = vsel %vm643, %v640, %v642
      %v647 = vsel %vm225, %v628, 0
      %v649 = vsel %vm229, %v644, 0
      %v651 = vsel %vm229, %v645, 0
      %653 = vmatpush.msra.mxu0 0.0
      %654 = vmatpush.msra.mxu0 0.0
      %655 = vmatpush.msra.mxu0 0.0
      %656 = vmatpush.msra.mxu0 0.0
      %657 = vmatpush.msra.mxu0 0.0
      %658 = vmatpush.msra.mxu0 0.0
      %659 = vmatpush.msra.mxu0 0.0
      %660 = vmatpush.msra.mxu0 0.0
      %661 = vmatpush.msra.mxu0 0.0
      %662 = vmatpush.msra.mxu0 0.0
      %663 = vmatpush.msra.mxu0 0.0
      %664 = vmatpush.msra.mxu0 0.0
      %665 = vmatpush.msra.mxu0 0.0
      %666 = vmatpush.msra.mxu0 0.0
      %667 = vmatpush.msra.mxu0 0.0
      %668 = vmatpush.msra.mxu0 %v649
      %669 = vmatmul.f32.gmra.mxu0 %v647
      %v670 = vpop.f32.mrf.mxu0
      %v671 = vadd.f32 0.0, %v670
      %672 = vdwg.mxu0
      %673 = vmatpush.msra.mxu0 0.0
      %674 = vmatpush.msra.mxu0 0.0
      %675 = vmatpush.msra.mxu0 0.0
      %676 = vmatpush.msra.mxu0 0.0
      %677 = vmatpush.msra.mxu0 0.0
      %678 = vmatpush.msra.mxu0 0.0
      %679 = vmatpush.msra.mxu0 0.0
      %680 = vmatpush.msra.mxu0 0.0
      %681 = vmatpush.msra.mxu0 0.0
      %682 = vmatpush.msra.mxu0 0.0
      %683 = vmatpush.msra.mxu0 0.0
      %684 = vmatpush.msra.mxu0 0.0
      %685 = vmatpush.msra.mxu0 0.0
      %686 = vmatpush.msra.mxu0 0.0
      %687 = vmatpush.msra.mxu0 0.0
      %688 = vmatpush.msra.mxu0 %v651
      %689 = vmatmul.f32.gmra.mxu0 %v647
      %v690 = vpop.f32.mrf.mxu0
      %v691 = vadd.f32 0.0, %v690
      %692 = vdwg.mxu0
      %695 = vst [vmem:[#allocation1] ss:$2 sm:$0xff] %v621
      %s696 = scalar_lea.vmem [#allocation1], 16
      %697 = vst [vmem:[%s696] ss:$2 sm:$0xff] %v622
      %v698 = vld.sshfl [vmem:[#allocation1] sm:$0xff pattern:$0x75316420]
      %v699 = vld.sshfl [vmem:[#allocation1 + $0x8] sm:$0xff pattern:$0x75316420]
      %v700 = vld.sshfl [vmem:[#allocation1 + $0x10] sm:$0xff pattern:$0x75316420]
      %701 = vrot.lane.b32.xlu0 %v698, 15
      %v702 = vpop.permute.xlu0 %701
      %703 = vrot.lane.b32.xlu0 %v699, 15
      %v704 = vpop.permute.xlu0 %703
      %705 = vrot.lane.b32.xlu0 %v700, 15
      %v706 = vpop.permute.xlu0 %705
      %vm707 = vcmask 121856
      %v708 = vsel %vm707, %v702, %v704
      %v709 = vsel %vm707, %v704, %v706
      %v711 = vsel %vm225, %v624, 0
      %v713 = vsel %vm229, %v708, 0
      %v715 = vsel %vm229, %v709, 0
      %717 = vmatpush.msra.mxu0 0.0
      %718 = vmatpush.msra.mxu0 0.0
      %719 = vmatpush.msra.mxu0 0.0
      %720 = vmatpush.msra.mxu0 0.0
      %721 = vmatpush.msra.mxu0 0.0
      %722 = vmatpush.msra.mxu0 0.0
      %723 = vmatpush.msra.mxu0 0.0
      %724 = vmatpush.msra.mxu0 0.0
      %725 = vmatpush.msra.mxu0 0.0
      %726 = vmatpush.msra.mxu0 0.0
      %727 = vmatpush.msra.mxu0 0.0
      %728 = vmatpush.msra.mxu0 0.0
      %729 = vmatpush.msra.mxu0 0.0
      %730 = vmatpush.msra.mxu0 0.0
      %731 = vmatpush.msra.mxu0 0.0
      %732 = vmatpush.msra.mxu0 %v713
      %733 = vmatmul.f32.gmra.mxu0 %v711
      %v734 = vpop.f32.mrf.mxu0
      %v735 = vadd.f32 %v671, %v734
      %736 = vdwg.mxu0
      %737 = vmatpush.msra.mxu0 0.0
      %738 = vmatpush.msra.mxu0 0.0
      %739 = vmatpush.msra.mxu0 0.0
      %740 = vmatpush.msra.mxu0 0.0
      %741 = vmatpush.msra.mxu0 0.0
      %742 = vmatpush.msra.mxu0 0.0
      %743 = vmatpush.msra.mxu0 0.0
      %744 = vmatpush.msra.mxu0 0.0
      %745 = vmatpush.msra.mxu0 0.0
      %746 = vmatpush.msra.mxu0 0.0
      %747 = vmatpush.msra.mxu0 0.0
      %748 = vmatpush.msra.mxu0 0.0
      %749 = vmatpush.msra.mxu0 0.0
      %750 = vmatpush.msra.mxu0 0.0
      %751 = vmatpush.msra.mxu0 0.0
      %752 = vmatpush.msra.mxu0 %v715
      %753 = vmatmul.f32.gmra.mxu0 %v711
      %v754 = vpop.f32.mrf.mxu0
      %v755 = vadd.f32 %v691, %v754
      %756 = vdwg.mxu0
      %v757 = vld [vmem:[#allocation2 + $0x4] sm:$0xff]
      %v758 = vld [vmem:[#allocation2 + $0xc] sm:$0xf]
      %s759 = scalar_lea.vmem %s1, 64
      %v760 = vld [vmem:[%s759] sm:$0xff]
      %763 = vst [vmem:[#allocation1] ss:$2 sm:$0xff] %v757
      %s764 = scalar_lea.vmem [#allocation1], 16
      %765 = vst [vmem:[%s764] ss:$2 sm:$0xff] %v758
      %v766 = vld.sshfl [vmem:[#allocation1] sm:$0xff pattern:$0x75316420]
      %v767 = vld.sshfl [vmem:[#allocation1 + $0x8] sm:$0xff pattern:$0x75316420]
      %v768 = vld.sshfl [vmem:[#allocation1 + $0x10] sm:$0xff pattern:$0x75316420]
      %769 = vrot.lane.b32.xlu0 %v766, 111
      %v770 = vpop.permute.xlu0 %769
      %771 = vrot.lane.b32.xlu0 %v767, 111
      %v772 = vpop.permute.xlu0 %771
      %773 = vrot.lane.b32.xlu0 %v768, 111
      %v774 = vpop.permute.xlu0 %773
      %vm775 = vcmask 908288
      %v776 = vsel %vm775, %v770, %v772
      %v777 = vsel %vm775, %v772, %v774
      %v779 = vsel %vm225, %v760, 0
      %v781 = vsel %vm229, %v776, 0
      %v783 = vsel %vm229, %v777, 0
      %785 = vmatpush.msra.mxu0 0.0
      %786 = vmatpush.msra.mxu0 0.0
      %787 = vmatpush.msra.mxu0 0.0
      %788 = vmatpush.msra.mxu0 0.0
      %789 = vmatpush.msra.mxu0 0.0
      %790 = vmatpush.msra.mxu0 0.0
      %791 = vmatpush.msra.mxu0 0.0
      %792 = vmatpush.msra.mxu0 0.0
      %793 = vmatpush.msra.mxu0 0.0
      %794 = vmatpush.msra.mxu0 0.0
      %795 = vmatpush.msra.mxu0 0.0
      %796 = vmatpush.msra.mxu0 0.0
      %797 = vmatpush.msra.mxu0 0.0
      %798 = vmatpush.msra.mxu0 0.0
      %799 = vmatpush.msra.mxu0 0.0
      %800 = vmatpush.msra.mxu0 %v781
      %801 = vmatmul.f32.gmra.mxu0 %v779
      %v802 = vpop.f32.mrf.mxu0
      %v803 = vadd.f32 0.0, %v802
      %804 = vdwg.mxu0
      %805 = vmatpush.msra.mxu0 0.0
      %806 = vmatpush.msra.mxu0 0.0
      %807 = vmatpush.msra.mxu0 0.0
      %808 = vmatpush.msra.mxu0 0.0
      %809 = vmatpush.msra.mxu0 0.0
      %810 = vmatpush.msra.mxu0 0.0
      %811 = vmatpush.msra.mxu0 0.0
      %812 = vmatpush.msra.mxu0 0.0
      %813 = vmatpush.msra.mxu0 0.0
      %814 = vmatpush.msra.mxu0 0.0
      %815 = vmatpush.msra.mxu0 0.0
      %816 = vmatpush.msra.mxu0 0.0
      %817 = vmatpush.msra.mxu0 0.0
      %818 = vmatpush.msra.mxu0 0.0
      %819 = vmatpush.msra.mxu0 0.0
      %820 = vmatpush.msra.mxu0 %v783
      %821 = vmatmul.f32.gmra.mxu0 %v779
      %v822 = vpop.f32.mrf.mxu0
      %v823 = vadd.f32 0.0, %v822
      %824 = vdwg.mxu0
      %v825 = vadd.f32 %v735, %v803
      %v826 = vadd.f32 %v755, %v823
      %v827 = vsel %vm619, 1, 0
      %v828 = vsel %vm620, 1, 0
      %vm829 = vcmp.eq.s32.totalorder %v827, 1
      %vm830 = vcmp.eq.s32.totalorder %v828, 1
      %v831 = vsel %vm829, %v825, 0.0
      %v832 = vsel %vm830, %v826, 0.0
      %v833 = vadd.f32 %v617, %v831
      %v834 = vadd.f32 %v618, %v832
      %835 = vst [vmem:[%s177] sm:$0xff] %v833
      %836 = vst [vmem:[%s177 + $0x8] sm:$0xff] %v834
      %v837 = vadd.f32 %v833, %v834
      %838 = vadd.xlane.f32.xlu0 %v837
      %v839 = vpop.xlane.xlu0 %838
      %v840 = vmul.f32 %v833, %v833
      %v841 = vmul.f32 %v834, %v834
      %v842 = vadd.f32 %v840, %v841
      %843 = vadd.xlane.f32.xlu0 %v842
      %v844 = vpop.xlane.xlu0 %843
      %vm845 = vcmp.eq.s32.totalorder %v188, 0
      %v846 = vsel %vm845, 1, 0
      %vm847 = vcmp.eq.s32.totalorder %v846, 1
      %v848 = vsel %vm847, %v839, %v844
      %vm849 = vcmask 15360
      %850 = vst.msk [vmem:[%s181] sm:$0xff] %vm849, %v848
      %p851 = scmp.lt.s32.totalorder %s15, 1
      %s852 = scalar_select %p851, %s15, 1
      %s853 = smul.addr %s852, 2
      %s854 = smul.addr %s853, 8
      %s855 = scalar_lea.vmem %s2, %s854
      %p856 = scmp.lt.s32.totalorder %s15, 1
      %s857 = scalar_select %p856, %s15, 1
      %s858 = smul.addr %s857, 8
      %s859 = scalar_lea.vmem %s3, %s858
      // Predicated region
      $region29: #{double_conv_forward.3} parent=27 // pred_check
        %p860 = pneg %p80
      $region30: #{double_conv_forward.3} parent=27 // pred_check_branch
        %862 = sbr.rel (%p860) target = $region32
      $region31: #{double_conv_forward.3} parent=27 // pred_region
        _
      $region32: #{double_conv_forward.3} parent=27 // pred_fallthru
        _
      // Predicated region
      $region33: #{double_conv_forward.3} parent=27 // pred_check
        %p863 = pneg %p106
      $region34: #{double_conv_forward.3} parent=27 // pred_check_branch
        %865 = sbr.rel (%p863) target = $region36
      $region35: #{double_conv_forward.3} parent=27 // pred_region
        _
      $region36: #{double_conv_forward.3} parent=27 // pred_fallthru
        _
    $region28: #{double_conv_forward.3} parent=5 // pred_fallthru
      _
    %p866 = scmp.le.s32.totalorder 2, %s10
    // Predicated region
    $region37: #{double_conv_forward.3} parent=5 // pred_check
      %p867 = pneg %p866
    $region38: #{double_conv_forward.3} parent=5 // pred_check_branch
      %869 = sbr.rel (%p867) target = $region40
    $region39: #{double_conv_forward.3} parent=5 // pred_region
      %s870 = ssub.s32 %s10, 2
      // Predicated region
      $region41: #{double_conv_forward.3} parent=39 // pred_check
        %p871 = pneg %p86
      $region42: #{double_conv_forward.3} parent=39 // pred_check_branch
        %873 = sbr.rel (%p871) target = $region44
      $region43: #{double_conv_forward.3} parent=39 // pred_region
        %p874 = scmp.lt.s32.totalorder %s16, 1
        %s875 = scalar_select %p874, %s16, 1
        %s876 = smul.addr %s875, 2
        %s877 = smul.addr %s876, 8
        %s878 = scalar_lea.vmem %s2, %s877
      $region44: #{double_conv_forward.3} parent=39 // pred_fallthru
        _
      // Predicated region
      $region45: #{double_conv_forward.3} parent=39 // pred_check
        %p879 = pneg %p112
      $region46: #{double_conv_forward.3} parent=39 // pred_check_branch
        %881 = sbr.rel (%p879) target = $region48
      $region47: #{double_conv_forward.3} parent=39 // pred_region
        %p882 = scmp.lt.s32.totalorder %s16, 1
        %s883 = scalar_select %p882, %s16, 1
        %s884 = smul.addr %s883, 8
        %s885 = scalar_lea.vmem %s3, %s884
      $region48: #{double_conv_forward.3} parent=39 // pred_fallthru
        _
    $region40: #{double_conv_forward.3} parent=5 // pred_fallthru
      _
  $region6: #{double_conv_forward.3} parent=0 // loop_footer
    %s14 = sadd.s32 1, %s10
  $region7: #{double_conv_forward.3} parent=0 // loop_footer_branch
    %9 = sbr.rel target = $region3
  $region8: #{double_conv_forward.3} parent=0 // loop_exit
    _

// kernel: double_conv_forward.4
$region0: #{double_conv_forward.4}
  #allocation0 [shape = 'u32[]', space=smem, size = 0x4, offset = 0x4, fixed_abs, tag = 'smem constant byte address 0x4 - core index']
  #allocation1 [shape = 'u32[72,128]{1,0:T(1,128)}', space=vmem, size = 0x9000, scoped, tag = 'internal scratch']
  #allocation2 [shape = 'f32[8,401]{1,0:T(8,128)}', space=vmem, size = 0x4000, scoped, tag = 'scratch operand']
  %s0 = inlined_call_operand.vmem [shape: f32[2,8,256], index: 0, kind: input, shape index: {}]
  %s1 = inlined_call_operand.vmem [shape: f32[8,1], index: 1, kind: input, shape index: {}]
  %s2 = inlined_call_operand.vmem [shape: f32[8,1], index: 2, kind: input, shape index: {}]
  %s3 = inlined_call_operand.vmem [shape: f32[9,8,8], index: 3, kind: input, shape index: {}]
  %s4 = inlined_call_operand.vmem [shape: f32[2,8,256], index: 4, kind: output, shape index: {0}]
  %s5 = inlined_call_operand.vmem [shape: f32[2,8,2], index: 5, kind: output, shape index: {1}]
  %6 = xla_tuple %s4, %s5
  %s7 = sld [smem:[#allocation0]]
  $region57: #{double_conv_forward.4} parent=0
    _
  %s9 = ssub.s32 1, %s7
  %s10 = scalar_select 0, %s9, %s7
  loop: start=0, step=1, limit=4
  $region2: #{double_conv_forward.4} parent=0 // loop_pre_header
    _
  $region3: #{double_conv_forward.4} parent=0 // loop_header
    %s12 = sphi 0, %s16
    %p13 = scmp.ge.s32.totalorder %s12, 4
    %s22 = sphi 0, %s24
    %s25 = sphi 0, %s22
    %s26 = sphi 0, %s25
    %s42 = sphi 0, %s26
    %s46 = sphi 0, %s46
    %s48 = sphi 0, %s46
    %s49 = sphi 0, %s48
    %s63 = sphi 0, %s49
    %s67 = sphi 0, %s67
    %s69 = sphi 0, %s67
    %s70 = sphi 0, %s69
    %s84 = sphi 0, %s70
    %s88 = sphi 0, %s88
    %s90 = sphi 0, %s88
    %s91 = sphi 0, %s90
    %s105 = sphi 0, %s91
    %s111 = sphi 0, %s113
    %s114 = sphi 0, %s111
    %s115 = sphi 0, %s114
    %s131 = sphi 0, %s115
    %s137 = sphi 0, %s139
    %s140 = sphi 0, %s137
    %s141 = sphi 0, %s140
    %s157 = sphi 0, %s141
  $region4: #{double_conv_forward.4} parent=0 // loop_header_branch
    %15 = sbr.rel (%p13) target = $region8
  $region5: #{double_conv_forward.4} parent=0 // loop_body
    %s17 = ssub.s32 %s12, 1
    %s18 = ssub.s32 %s12, 2
    %s19 = sadd.s32 %s12, 1
    %s20 = ssub.s32 %s12, %s19
    %p21 = scmp.eq.s32.totalorder %s20, 0
    %s23 = sadd.s32 %s22, 1
    %s24 = scalar_select %p21, %s22, %s23
    %p27 = pneg %p21
    %p28 = scmp.eq.s32.totalorder %s12, 1
    %p29 = por %p27, %p28
    %p30 = scmp.ne.s32.totalorder %s22, %s25
    %p31 = scmp.eq.s32.totalorder %s12, 0
    %p32 = por %p30, %p31
    %p33 = scmp.ne.s32.totalorder %s22, %s25
    %p34 = scmp.eq.s32.totalorder %s17, 1
    %p35 = por %p33, %p34
    %p36 = scmp.ne.s32.totalorder %s25, %s26
    %p37 = scmp.eq.s32.totalorder %s17, 0
    %p38 = por %p36, %p37
    %p39 = scmp.ne.s32.totalorder %s25, %s26
    %p40 = scmp.eq.s32.totalorder %s18, 1
    %p41 = por %p39, %p40
    %p43 = scmp.ne.s32.totalorder %s26, %s42
    %p44 = scmp.eq.s32.totalorder %s18, 0
    %p45 = por %p43, %p44
    %s47 = sadd.s32 %s46, 1
    %p50 = scmp.eq.s32.totalorder %s12, 1
    %p51 = scmp.ne.s32.totalorder %s46, %s48
    %p52 = scmp.eq.s32.totalorder %s12, 0
    %p53 = por %p51, %p52
    %p54 = scmp.ne.s32.totalorder %s46, %s48
    %p55 = scmp.eq.s32.totalorder %s17, 1
    %p56 = por %p54, %p55
    %p57 = scmp.ne.s32.totalorder %s48, %s49
    %p58 = scmp.eq.s32.totalorder %s17, 0
    %p59 = por %p57, %p58
    %p60 = scmp.ne.s32.totalorder %s48, %s49
    %p61 = scmp.eq.s32.totalorder %s18, 1
    %p62 = por %p60, %p61
    %p64 = scmp.ne.s32.totalorder %s49, %s63
    %p65 = scmp.eq.s32.totalorder %s18, 0
    %p66 = por %p64, %p65
    %s68 = sadd.s32 %s67, 1
    %p71 = scmp.eq.s32.totalorder %s12, 1
    %p72 = scmp.ne.s32.totalorder %s67, %s69
    %p73 = scmp.eq.s32.totalorder %s12, 0
    %p74 = por %p72, %p73
    %p75 = scmp.ne.s32.totalorder %s67, %s69
    %p76 = scmp.eq.s32.totalorder %s17, 1
    %p77 = por %p75, %p76
    %p78 = scmp.ne.s32.totalorder %s69, %s70
    %p79 = scmp.eq.s32.totalorder %s17, 0
    %p80 = por %p78, %p79
    %p81 = scmp.ne.s32.totalorder %s69, %s70
    %p82 = scmp.eq.s32.totalorder %s18, 1
    %p83 = por %p81, %p82
    %p85 = scmp.ne.s32.totalorder %s70, %s84
    %p86 = scmp.eq.s32.totalorder %s18, 0
    %p87 = por %p85, %p86
    %s89 = sadd.s32 %s88, 1
    %p92 = scmp.eq.s32.totalorder %s12, 1
    %p93 = scmp.ne.s32.totalorder %s88, %s90
    %p94 = scmp.eq.s32.totalorder %s12, 0
    %p95 = por %p93, %p94
    %p96 = scmp.ne.s32.totalorder %s88, %s90
    %p97 = scmp.eq.s32.totalorder %s17, 1
    %p98 = por %p96, %p97
    %p99 = scmp.ne.s32.totalorder %s90, %s91
    %p100 = scmp.eq.s32.totalorder %s17, 0
    %p101 = por %p99, %p100
    %p102 = scmp.ne.s32.totalorder %s90, %s91
    %p103 = scmp.eq.s32.totalorder %s18, 1
    %p104 = por %p102, %p103
    %p106 = scmp.ne.s32.totalorder %s91, %s105
    %p107 = scmp.eq.s32.totalorder %s18, 0
    %p108 = por %p106, %p107
    %s109 = ssub.s32 %s12, %s19
    %p110 = scmp.eq.s32.totalorder %s109, 0
    %s112 = sadd.s32 %s111, 1
    %s113 = scalar_select %p110, %s111, %s112
    %p116 = pneg %p110
    %p117 = scmp.eq.s32.totalorder %s12, 1
    %p118 = por %p116, %p117
    %p119 = scmp.ne.s32.totalorder %s111, %s114
    %p120 = scmp.eq.s32.totalorder %s12, 0
    %p121 = por %p119, %p120
    %p122 = scmp.ne.s32.totalorder %s111, %s114
    %p123 = scmp.eq.s32.totalorder %s17, 1
    %p124 = por %p122, %p123
    %p125 = scmp.ne.s32.totalorder %s114, %s115
    %p126 = scmp.eq.s32.totalorder %s17, 0
    %p127 = por %p125, %p126
    %p128 = scmp.ne.s32.totalorder %s114, %s115
    %p129 = scmp.eq.s32.totalorder %s18, 1
    %p130 = por %p128, %p129
    %p132 = scmp.ne.s32.totalorder %s115, %s131
    %p133 = scmp.eq.s32.totalorder %s18, 0
    %p134 = por %p132, %p133
    %s135 = ssub.s32 %s12, %s19
    %p136 = scmp.eq.s32.totalorder %s135, 0
    %s138 = sadd.s32 %s137, 1
    %s139 = scalar_select %p136, %s137, %s138
    %p142 = pneg %p136
    %p143 = scmp.eq.s32.totalorder %s12, 1
    %p144 = por %p142, %p143
    %p145 = scmp.ne.s32.totalorder %s137, %s140
    %p146 = scmp.eq.s32.totalorder %s12, 0
    %p147 = por %p145, %p146
    %p148 = scmp.ne.s32.totalorder %s137, %s140
    %p149 = scmp.eq.s32.totalorder %s17, 1
    %p150 = por %p148, %p149
    %p151 = scmp.ne.s32.totalorder %s140, %s141
    %p152 = scmp.eq.s32.totalorder %s17, 0
    %p153 = por %p151, %p152
    %p154 = scmp.ne.s32.totalorder %s140, %s141
    %p155 = scmp.eq.s32.totalorder %s18, 1
    %p156 = por %p154, %p155
    %p158 = scmp.ne.s32.totalorder %s141, %s157
    %p159 = scmp.eq.s32.totalorder %s18, 0
    %p160 = por %p158, %p159
    %p161 = scmp.le.s32.totalorder 1, %s12
    %p162 = scmp.lt.s32.totalorder %s12, 3
    %p163 = pnand %p161, %p162
    %p164 = pneg %p163
    // Predicated region
    $region9: #{double_conv_forward.4} parent=5 // pred_check
      _
    $region10: #{double_conv_forward.4} parent=5 // pred_check_branch
      %166 = sbr.rel (%p163) target = $region12
    $region11: #{double_conv_forward.4} parent=5 // pred_region
      %s167 = ssub.s32 %s12, 1
      // Predicated region
      $region13: #{double_conv_forward.4} parent=11 // pred_check
        %p168 = pneg %p59
      $region14: #{double_conv_forward.4} parent=11 // pred_check_branch
        %170 = sbr.rel (%p168) target = $region16
      $region15: #{double_conv_forward.4} parent=11 // pred_region
        _
      $region16: #{double_conv_forward.4} parent=11 // pred_fallthru
        _
      // Predicated region
      $region17: #{double_conv_forward.4} parent=11 // pred_check
        %p171 = pneg %p80
      $region18: #{double_conv_forward.4} parent=11 // pred_check_branch
        %173 = sbr.rel (%p171) target = $region20
      $region19: #{double_conv_forward.4} parent=11 // pred_region
        _
      $region20: #{double_conv_forward.4} parent=11 // pred_fallthru
        _
      // Predicated region
      $region21: #{double_conv_forward.4} parent=11 // pred_check
        %p174 = pneg %p101
      $region22: #{double_conv_forward.4} parent=11 // pred_check_branch
        %176 = sbr.rel (%p174) target = $region24
      $region23: #{double_conv_forward.4} parent=11 // pred_region
        _
      $region24: #{double_conv_forward.4} parent=11 // pred_fallthru
        _
    $region12: #{double_conv_forward.4} parent=5 // pred_fallthru
      _
    %p177 = scmp.lt.s32.totalorder %s12, 2
    // Predicated region
    $region25: #{double_conv_forward.4} parent=5 // pred_check
      %p178 = pneg %p177
    $region26: #{double_conv_forward.4} parent=5 // pred_check_branch
      %180 = sbr.rel (%p178) target = $region28
    $region27: #{double_conv_forward.4} parent=5 // pred_region
      // Predicated region
      $region29: #{double_conv_forward.4} parent=27 // pred_check
        %p181 = pneg %p32
      $region30: #{double_conv_forward.4} parent=27 // pred_check_branch
        %183 = sbr.rel (%p181) target = $region32
      $region31: #{double_conv_forward.4} parent=27 // pred_region
        %p184 = scmp.lt.s32.totalorder %s12, 1
        %s185 = scalar_select %p184, %s12, 1
        %s186 = smul.addr %s185, 2
        %s187 = smul.addr %s186, 8
        %s188 = scalar_lea.vmem %s0, %s187
      $region32: #{double_conv_forward.4} parent=27 // pred_fallthru
        _
    $region28: #{double_conv_forward.4} parent=5 // pred_fallthru
      _
    %p189 = scmp.le.s32.totalorder 1, %s12
    %p190 = scmp.lt.s32.totalorder %s12, 3
    %p191 = pnand %p189, %p190
    %p192 = pneg %p191
    // Predicated region
    $region33: #{double_conv_forward.4} parent=5 // pred_check
      _
    $region34: #{double_conv_forward.4} parent=5 // pred_check_branch
      %194 = sbr.rel (%p191) target = $region36
    $region35: #{double_conv_forward.4} parent=5 // pred_region
      %s195 = ssub.s32 %s12, 1
      %p196 = scmp.lt.s32.totalorder %s17, 1
      %s197 = scalar_select %p196, %s17, 1
      %s198 = smul.addr %s197, 2
      %s199 = smul.addr %s198, 8
      %s200 = scalar_lea.vmem %s0, %s199
      %p201 = pneg %p38
      %p202 = pneg %p35
      %p203 = pneg %p59
      %p204 = pneg %p56
      %p205 = pneg %p80
      %p206 = pneg %p77
      %p207 = pneg %p101
      %p208 = pneg %p98
      %p209 = pneg %p127
      %p210 = pneg %p124
      %p211 = scmp.lt.s32.totalorder %s17, 1
      %s212 = scalar_select %p211, %s17, 1
      %s213 = smul.addr %s212, 2
      %s214 = smul.addr %s213, 8
      %s215 = scalar_lea.vmem %s4, %s214
      %p216 = pneg %p153
      %p217 = pneg %p150
      %p218 = scmp.lt.s32.totalorder %s17, 1
      %s219 = scalar_select %p218, %s17, 1
      %s220 = smul.addr %s219, 8
      %s221 = scalar_lea.vmem %s5, %s220
      %p222 = scmp.lt.s32.totalorder %s17, 1
      %s223 = scalar_select %p222, %s17, 1
      %s224 = smul.addr %s223, 2
      %s225 = smul.addr %s224, 8
      %s226 = scalar_lea.vmem %s0, %s225
      %p227 = scmp.lt.s32.totalorder %s17, 1
      %s228 = scalar_select %p227, %s17, 1
      %s229 = smul.addr %s228, 2
      %s230 = smul.addr %s229, 8
      %s231 = scalar_lea.vmem %s4, %s230
      %p232 = scmp.lt.s32.totalorder %s17, 1
      %s233 = scalar_select %p232, %s17, 1
      %s234 = smul.addr %s233, 8
      %s235 = scalar_lea.vmem %s5, %s234
      %v236 = vld [vmem:[%s226] sm:$0xff]
      %v237 = vld [vmem:[%s226 + $0x8] sm:$0xff]
      %v238 = vld [vmem:[%s1] sm:$0xff]
      %240 = vset.pattern.permute.xlu0 0
      %241 = vperm.xlu0 %240, %v238
      %v242 = vpop.permute.xlu0 %241
      %v244 = vmul.f32 %v236, %v242
      %v245 = vmul.f32 %v237, %v242
      %v246 = vld [vmem:[%s2] sm:$0xff]
      %248 = vset.pattern.permute.xlu0 0
      %249 = vperm.xlu0 %248, %v246
      %v250 = vpop.permute.xlu0 %249
      %v252 = vadd.f32 %v244, %v250
      %v253 = vadd.f32 %v245, %v250
      %v254 = vmax.f32 %v252, 0.0
      %v255 = vmax.f32 %v253, 0.0
      %256 = vst [vmem:[#allocation2] sm:$0xff] 0.0
      %257 = vst [vmem:[#allocation2 + $0x8] sm:$0xff] %v254
      %258 = vst [vmem:[#allocation2 + $0x10] sm:$0xff] %v255
      %vm259 = vcmask 138240
      %260 = vst.msk [vmem:[#allocation2 + $0x18] sm:$0xff] %vm259, 0.0
      %v261 = vlaneseq
      %v262 = vand.u32 %v261, 127
      %v263 = vadd.s32 %v262, 128
      %vm264 = vcmp.lt.s32.totalorder %v262, 0
      %v265 = vsub.s32 0, %v262
      %v266 = vsel %vm264, %v265, %v262
      %v267 = vshrl.u32 %v266, 4
      %v268 = vand.u32 %v266, 15
      %v269 = vsub.s32 0, %v268
      %v270 = vsel %vm264, %v269, %v268
      %vm271 = vcmp.lt.s32.totalorder %v263, 0
      %v272 = vsub.s32 0, %v263
      %v273 = vsel %vm271, %v272, %v263
      %v274 = vshrl.u32 %v273, 4
      %v275 = vand.u32 %v273, 15
      %v276 = vsub.s32 0, %v275
      %v277 = vsel %vm271, %v276, %v275
      %vm278 = vcmp.ne.s32.totalorder %v270, 0
      %vm279 = vcmp.ne.s32.totalorder %v277, 0
      %vm280 = vcmp.lt.s32.totalorder %v270, 0
      %vm281 = vcmp.lt.s32.totalorder %v277, 0
      %vm282 = vmand %vm280, %vm278
      %vm283 = vmand %vm281, %vm279
      %v284 = vadd.s32 %v270, 16
      %v285 = vadd.s32 %v277, 16
      %v286 = vsel %vm282, %v284, %v270
      %v287 = vsel %vm283, %v285, %v277
      %v288 = vld [vmem:[#allocation2] sm:$0xff]
      %v289 = vld [vmem:[#allocation2 + $0x8] sm:$0xff]
      %v290 = vld [vmem:[#allocation2 + $0x10] sm:$0xff]
      %s291 = scalar_lea.vmem %s3, 8
      %v292 = vld [vmem:[%s291] sm:$0xff]
      %s293 = scalar_lea.vmem %s3, 32
      %v294 = vld [vmem:[%s293] sm:$0xff]
      %vm295 = vcmask 64512
      %v297 = vsel %vm295, %v294, 0
      %299 = vmatpush.msra.mxu0 0.0
      %300 = vmatpush.msra.mxu0 0.0
      %301 = vmatpush.msra.mxu0 0.0
      %302 = vmatpush.msra.mxu0 0.0
      %303 = vmatpush.msra.mxu0 0.0
      %304 = vmatpush.msra.mxu0 0.0
      %305 = vmatpush.msra.mxu0 0.0
      %306 = vmatpush.msra.mxu0 0.0
      %307 = vmatpush.msra.mxu0 0.0
      %308 = vmatpush.msra.mxu0 0.0
      %309 = vmatpush.msra.mxu0 0.0
      %310 = vmatpush.msra.mxu0 0.0
      %311 = vmatpush.msra.mxu0 0.0
      %312 = vmatpush.msra.mxu0 0.0
      %313 = vmatpush.msra.mxu0 0.0
      %314 = vmatpush.msra.mxu0 %v289
      %315 = vmatmul.f32.gmra.mxu0 %v297
      %v316 = vpop.f32.mrf.mxu0
      %v317 = vadd.f32 0.0, %v316
      %318 = vdwg.mxu0
      %319 = vmatpush.msra.mxu0 0.0
      %320 = vmatpush.msra.mxu0 0.0
      %321 = vmatpush.msra.mxu0 0.0
      %322 = vmatpush.msra.mxu0 0.0
      %323 = vmatpush.msra.mxu0 0.0
      %324 = vmatpush.msra.mxu0 0.0
      %325 = vmatpush.msra.mxu0 0.0
      %326 = vmatpush.msra.mxu0 0.0
      %327 = vmatpush.msra.mxu0 0.0
      %328 = vmatpush.msra.mxu0 0.0
      %329 = vmatpush.msra.mxu0 0.0
      %330 = vmatpush.msra.mxu0 0.0
      %331 = vmatpush.msra.mxu0 0.0
      %332 = vmatpush.msra.mxu0 0.0
      %333 = vmatpush.msra.mxu0 0.0
      %334 = vmatpush.msra.mxu0 %v290
      %335 = vmatmul.f32.gmra.mxu0 %v297
      %v336 = vpop.f32.mrf.mxu0
      %v337 = vadd.f32 0.0, %v336
      %338 = vdwg.mxu0
      %342 = vrot.lane.b32.xlu0 %v288, 16
      %v343 = vpop.permute.xlu0 %342
      %344 = vrot.lane.b32.xlu0 %v289, 16
      %v345 = vpop.permute.xlu0 %344
      %346 = vrot.lane.b32.xlu0 %v290, 16
      %v347 = vpop.permute.xlu0 %346
      %vm348 = vcmask 130048
      %v349 = vsel %vm348, %v343, %v345
      %v350 = vsel %vm348, %v345, %v347
      %v354 = vsel %vm295, %v292, 0
      %356 = vmatpush.msra.mxu0 0.0
      %357 = vmatpush.msra.mxu0 0.0
      %358 = vmatpush.msra.mxu0 0.0
      %359 = vmatpush.msra.mxu0 0.0
      %360 = vmatpush.msra.mxu0 0.0
      %361 = vmatpush.msra.mxu0 0.0
      %362 = vmatpush.msra.mxu0 0.0
      %363 = vmatpush.msra.mxu0 0.0
      %364 = vmatpush.msra.mxu0 0.0
      %365 = vmatpush.msra.mxu0 0.0
      %366 = vmatpush.msra.mxu0 0.0
      %367 = vmatpush.msra.mxu0 0.0
      %368 = vmatpush.msra.mxu0 0.0
      %369 = vmatpush.msra.mxu0 0.0
      %370 = vmatpush.msra.mxu0 0.0
      %371 = vmatpush.msra.mxu0 %v349
      %372 = vmatmul.f32.gmra.mxu0 %v354
      %v373 = vpop.f32.mrf.mxu0
      %v374 = vadd.f32 %v317, %v373
      %375 = vdwg.mxu0
      %376 = vmatpush.msra.mxu0 0.0
      %377 = vmatpush.msra.mxu0 0.0
      %378 = vmatpush.msra.mxu0 0.0
      %379 = vmatpush.msra.mxu0 0.0
      %380 = vmatpush.msra.mxu0 0.0
      %381 = vmatpush.msra.mxu0 0.0
      %382 = vmatpush.msra.mxu0 0.0
      %383 = vmatpush.msra.mxu0 0.0
      %384 = vmatpush.msra.mxu0 0.0
      %385 = vmatpush.msra.mxu0 0.0
      %386 = vmatpush.msra.mxu0 0.0
      %387 = vmatpush.msra.mxu0 0.0
      %388 = vmatpush.msra.mxu0 0.0
      %389 = vmatpush.msra.mxu0 0.0
      %390 = vmatpush.msra.mxu0 0.0
      %391 = vmatpush.msra.mxu0 %v350
      %392 = vmatmul.f32.gmra.mxu0 %v354
      %v393 = vpop.f32.mrf.mxu0
      %v394 = vadd.f32 %v337, %v393
      %395 = vdwg.mxu0
      %v396 = vld [vmem:[#allocation2 + $0x8] sm:$0xff]
      %v397 = vld [vmem:[#allocation2 + $0x10] sm:$0xff]
      %v398 = vld [vmem:[#allocation2 + $0x18] sm:$0xff]
      %s399 = scalar_lea.vmem %s3, 56
      %v400 = vld [vmem:[%s399] sm:$0xff]
      %404 = vrot.lane.b32.xlu0 %v396, 112
      %v405 = vpop.permute.xlu0 %404
      %406 = vrot.lane.b32.xlu0 %v397, 112
      %v407 = vpop.permute.xlu0 %406
      %408 = vrot.lane.b32.xlu0 %v398, 112
      %v409 = vpop.permute.xlu0 %408
      %vm410 = vcmask 916480
      %v411 = vsel %vm410, %v405, %v407
      %v412 = vsel %vm410, %v407, %v409
      %v416 = vsel %vm295, %v400, 0
      %418 = vmatpush.msra.mxu0 0.0
      %419 = vmatpush.msra.mxu0 0.0
      %420 = vmatpush.msra.mxu0 0.0
      %421 = vmatpush.msra.mxu0 0.0
      %422 = vmatpush.msra.mxu0 0.0
      %423 = vmatpush.msra.mxu0 0.0
      %424 = vmatpush.msra.mxu0 0.0
      %425 = vmatpush.msra.mxu0 0.0
      %426 = vmatpush.msra.mxu0 0.0
      %427 = vmatpush.msra.mxu0 0.0
      %428 = vmatpush.msra.mxu0 0.0
      %429 = vmatpush.msra.mxu0 0.0
      %430 = vmatpush.msra.mxu0 0.0
      %431 = vmatpush.msra.mxu0 0.0
      %432 = vmatpush.msra.mxu0 0.0
      %433 = vmatpush.msra.mxu0 %v411
      %434 = vmatmul.f32.gmra.mxu0 %v416
      %v435 = vpop.f32.mrf.mxu0
      %v436 = vadd.f32 0.0, %v435
      %437 = vdwg.mxu0
      %438 = vmatpush.msra.mxu0 0.0
      %439 = vmatpush.msra.mxu0 0.0
      %440 = vmatpush.msra.mxu0 0.0
      %441 = vmatpush.msra.mxu0 0.0
      %442 = vmatpush.msra.mxu0 0.0
      %443 = vmatpush.msra.mxu0 0.0
      %444 = vmatpush.msra.mxu0 0.0
      %445 = vmatpush.msra.mxu0 0.0
      %446 = vmatpush.msra.mxu0 0.0
      %447 = vmatpush.msra.mxu0 0.0
      %448 = vmatpush.msra.mxu0 0.0
      %449 = vmatpush.msra.mxu0 0.0
      %450 = vmatpush.msra.mxu0 0.0
      %451 = vmatpush.msra.mxu0 0.0
      %452 = vmatpush.msra.mxu0 0.0
      %453 = vmatpush.msra.mxu0 %v412
      %454 = vmatmul.f32.gmra.mxu0 %v416
      %v455 = vpop.f32.mrf.mxu0
      %v456 = vadd.f32 0.0, %v455
      %457 = vdwg.mxu0
      %v458 = vadd.f32 %v374, %v436
      %v459 = vadd.f32 %v394, %v456
      %vm460 = vcmp.ge.s32.totalorder %v286, 1
      %vm461 = vcmp.ge.s32.totalorder %v287, 1
      %v462 = vld [vmem:[%s3] sm:$0xff]
      %s463 = scalar_lea.vmem %s3, 24
      %v464 = vld [vmem:[%s463] sm:$0xff]
      %465 = vrot.lane.b32.xlu0 %v288, 1
      %v466 = vpop.permute.xlu0 %465
      %467 = vrot.lane.b32.xlu0 %v289, 1
      %v468 = vpop.permute.xlu0 %467
      %469 = vrot.lane.b32.xlu0 %v290, 1
      %v470 = vpop.permute.xlu0 %469
      %vm471 = vcmask 7168
      %v472 = vsel %vm471, %v466, %v468
      %v473 = vsel %vm471, %v468, %v470
      %v477 = vsel %vm295, %v464, 0
      %479 = vmatpush.msra.mxu0 0.0
      %480 = vmatpush.msra.mxu0 0.0
      %481 = vmatpush.msra.mxu0 0.0
      %482 = vmatpush.msra.mxu0 0.0
      %483 = vmatpush.msra.mxu0 0.0
      %484 = vmatpush.msra.mxu0 0.0
      %485 = vmatpush.msra.mxu0 0.0
      %486 = vmatpush.msra.mxu0 0.0
      %487 = vmatpush.msra.mxu0 0.0
      %488 = vmatpush.msra.mxu0 0.0
      %489 = vmatpush.msra.mxu0 0.0
      %490 = vmatpush.msra.mxu0 0.0
      %491 = vmatpush.msra.mxu0 0.0
      %492 = vmatpush.msra.mxu0 0.0
      %493 = vmatpush.msra.mxu0 0.0
      %494 = vmatpush.msra.mxu0 %v472
      %495 = vmatmul.f32.gmra.mxu0 %v477
      %v496 = vpop.f32.mrf.mxu0
      %v497 = vadd.f32 0.0, %v496
      %498 = vdwg.mxu0
      %499 = vmatpush.msra.mxu0 0.0
      %500 = vmatpush.msra.mxu0 0.0
      %501 = vmatpush.msra.mxu0 0.0
      %502 = vmatpush.msra.mxu0 0.0
      %503 = vmatpush.msra.mxu0 0.0
      %504 = vmatpush.msra.mxu0 0.0
      %505 = vmatpush.msra.mxu0 0.0
      %506 = vmatpush.msra.mxu0 0.0
      %507 = vmatpush.msra.mxu0 0.0
      %508 = vmatpush.msra.mxu0 0.0
      %509 = vmatpush.msra.mxu0 0.0
      %510 = vmatpush.msra.mxu0 0.0
      %511 = vmatpush.msra.mxu0 0.0
      %512 = vmatpush.msra.mxu0 0.0
      %513 = vmatpush.msra.mxu0 0.0
      %514 = vmatpush.msra.mxu0 %v473
      %515 = vmatmul.f32.gmra.mxu0 %v477
      %v516 = vpop.f32.mrf.mxu0
      %v517 = vadd.f32 0.0, %v516
      %518 = vdwg.mxu0
      %519 = vrot.lane.b32.xlu0 %v288, 17
      %v520 = vpop.permute.xlu0 %519
      %521 = vrot.lane.b32.xlu0 %v289, 17
      %v522 = vpop.permute.xlu0 %521
      %523 = vrot.lane.b32.xlu0 %v290, 17
      %v524 = vpop.permute.xlu0 %523
      %v525 = vsel %vm259, %v520, %v522
      %v526 = vsel %vm259, %v522, %v524
      %v530 = vsel %vm295, %v462, 0
      %532 = vmatpush.msra.mxu0 0.0
      %533 = vmatpush.msra.mxu0 0.0
      %534 = vmatpush.msra.mxu0 0.0
      %535 = vmatpush.msra.mxu0 0.0
      %536 = vmatpush.msra.mxu0 0.0
      %537 = vmatpush.msra.mxu0 0.0
      %538 = vmatpush.msra.mxu0 0.0
      %539 = vmatpush.msra.mxu0 0.0
      %540 = vmatpush.msra.mxu0 0.0
      %541 = vmatpush.msra.mxu0 0.0
      %542 = vmatpush.msra.mxu0 0.0
      %543 = vmatpush.msra.mxu0 0.0
      %544 = vmatpush.msra.mxu0 0.0
      %545 = vmatpush.msra.mxu0 0.0
      %546 = vmatpush.msra.mxu0 0.0
      %547 = vmatpush.msra.mxu0 %v525
      %548 = vmatmul.f32.gmra.mxu0 %v530
      %v549 = vpop.f32.mrf.mxu0
      %v550 = vadd.f32 %v497, %v549
      %551 = vdwg.mxu0
      %552 = vmatpush.msra.mxu0 0.0
      %553 = vmatpush.msra.mxu0 0.0
      %554 = vmatpush.msra.mxu0 0.0
      %555 = vmatpush.msra.mxu0 0.0
      %556 = vmatpush.msra.mxu0 0.0
      %557 = vmatpush.msra.mxu0 0.0
      %558 = vmatpush.msra.mxu0 0.0
      %559 = vmatpush.msra.mxu0 0.0
      %560 = vmatpush.msra.mxu0 0.0
      %561 = vmatpush.msra.mxu0 0.0
      %562 = vmatpush.msra.mxu0 0.0
      %563 = vmatpush.msra.mxu0 0.0
      %564 = vmatpush.msra.mxu0 0.0
      %565 = vmatpush.msra.mxu0 0.0
      %566 = vmatpush.msra.mxu0 0.0
      %567 = vmatpush.msra.mxu0 %v526
      %568 = vmatmul.f32.gmra.mxu0 %v530
      %v569 = vpop.f32.mrf.mxu0
      %v570 = vadd.f32 %v517, %v569
      %571 = vdwg.mxu0
      %s572 = scalar_lea.vmem %s3, 48
      %v573 = vld [vmem:[%s572] sm:$0xff]
      %574 = vrot.lane.b32.xlu0 %v396, 113
      %v575 = vpop.permute.xlu0 %574
      %576 = vrot.lane.b32.xlu0 %v397, 113
      %v577 = vpop.permute.xlu0 %576
      %578 = vrot.lane.b32.xlu0 %v398, 113
      %v579 = vpop.permute.xlu0 %578
      %vm580 = vcmask 924672
      %v581 = vsel %vm580, %v575, %v577
      %v582 = vsel %vm580, %v577, %v579
      %v586 = vsel %vm295, %v573, 0
      %588 = vmatpush.msra.mxu0 0.0
      %589 = vmatpush.msra.mxu0 0.0
      %590 = vmatpush.msra.mxu0 0.0
      %591 = vmatpush.msra.mxu0 0.0
      %592 = vmatpush.msra.mxu0 0.0
      %593 = vmatpush.msra.mxu0 0.0
      %594 = vmatpush.msra.mxu0 0.0
      %595 = vmatpush.msra.mxu0 0.0
      %596 = vmatpush.msra.mxu0 0.0
      %597 = vmatpush.msra.mxu0 0.0
      %598 = vmatpush.msra.mxu0 0.0
      %599 = vmatpush.msra.mxu0 0.0
      %600 = vmatpush.msra.mxu0 0.0
      %601 = vmatpush.msra.mxu0 0.0
      %602 = vmatpush.msra.mxu0 0.0
      %603 = vmatpush.msra.mxu0 %v581
      %604 = vmatmul.f32.gmra.mxu0 %v586
      %v605 = vpop.f32.mrf.mxu0
      %v606 = vadd.f32 0.0, %v605
      %607 = vdwg.mxu0
      %608 = vmatpush.msra.mxu0 0.0
      %609 = vmatpush.msra.mxu0 0.0
      %610 = vmatpush.msra.mxu0 0.0
      %611 = vmatpush.msra.mxu0 0.0
      %612 = vmatpush.msra.mxu0 0.0
      %613 = vmatpush.msra.mxu0 0.0
      %614 = vmatpush.msra.mxu0 0.0
      %615 = vmatpush.msra.mxu0 0.0
      %616 = vmatpush.msra.mxu0 0.0
      %617 = vmatpush.msra.mxu0 0.0
      %618 = vmatpush.msra.mxu0 0.0
      %619 = vmatpush.msra.mxu0 0.0
      %620 = vmatpush.msra.mxu0 0.0
      %621 = vmatpush.msra.mxu0 0.0
      %622 = vmatpush.msra.mxu0 0.0
      %623 = vmatpush.msra.mxu0 %v582
      %624 = vmatmul.f32.gmra.mxu0 %v586
      %v625 = vpop.f32.mrf.mxu0
      %v626 = vadd.f32 0.0, %v625
      %627 = vdwg.mxu0
      %v628 = vadd.f32 %v550, %v606
      %v629 = vadd.f32 %v570, %v626
      %v630 = vsel %vm460, 1, 0
      %v631 = vsel %vm461, 1, 0
      %vm632 = vcmp.eq.s32.totalorder %v630, 1
      %vm633 = vcmp.eq.s32.totalorder %v631, 1
      %v634 = vsel %vm632, %v628, 0.0
      %v635 = vsel %vm633, %v629, 0.0
      %v636 = vadd.f32 %v458, %v634
      %v637 = vadd.f32 %v459, %v635
      %vm638 = vcmp.le.s32.totalorder %v286, 14
      %vm639 = vcmp.le.s32.totalorder %v287, 14
      %s640 = scalar_lea.vmem %s3, 16
      %v641 = vld [vmem:[%s640] sm:$0xff]
      %s642 = scalar_lea.vmem %s3, 40
      %v643 = vld [vmem:[%s642] sm:$0xff]
      %644 = vrot.lane.b32.xlu0 %v396, 127
      %v645 = vpop.permute.xlu0 %644
      %646 = vrot.lane.b32.xlu0 %v397, 127
      %v647 = vpop.permute.xlu0 %646
      %648 = vrot.lane.b32.xlu0 %v398, 127
      %v649 = vpop.permute.xlu0 %648
      %vm650 = vcmask 1039360
      %v651 = vsel %vm650, %v645, %v647
      %v652 = vsel %vm650, %v647, %v649
      %v656 = vsel %vm295, %v643, 0
      %658 = vmatpush.msra.mxu0 0.0
      %659 = vmatpush.msra.mxu0 0.0
      %660 = vmatpush.msra.mxu0 0.0
      %661 = vmatpush.msra.mxu0 0.0
      %662 = vmatpush.msra.mxu0 0.0
      %663 = vmatpush.msra.mxu0 0.0
      %664 = vmatpush.msra.mxu0 0.0
      %665 = vmatpush.msra.mxu0 0.0
      %666 = vmatpush.msra.mxu0 0.0
      %667 = vmatpush.msra.mxu0 0.0
      %668 = vmatpush.msra.mxu0 0.0
      %669 = vmatpush.msra.mxu0 0.0
      %670 = vmatpush.msra.mxu0 0.0
      %671 = vmatpush.msra.mxu0 0.0
      %672 = vmatpush.msra.mxu0 0.0
      %673 = vmatpush.msra.mxu0 %v651
      %674 = vmatmul.f32.gmra.mxu0 %v656
      %v675 = vpop.f32.mrf.mxu0
      %v676 = vadd.f32 0.0, %v675
      %677 = vdwg.mxu0
      %678 = vmatpush.msra.mxu0 0.0
      %679 = vmatpush.msra.mxu0 0.0
      %680 = vmatpush.msra.mxu0 0.0
      %681 = vmatpush.msra.mxu0 0.0
      %682 = vmatpush.msra.mxu0 0.0
      %683 = vmatpush.msra.mxu0 0.0
      %684 = vmatpush.msra.mxu0 0.0
      %685 = vmatpush.msra.mxu0 0.0
      %686 = vmatpush.msra.mxu0 0.0
      %687 = vmatpush.msra.mxu0 0.0
      %688 = vmatpush.msra.mxu0 0.0
      %689 = vmatpush.msra.mxu0 0.0
      %690 = vmatpush.msra.mxu0 0.0
      %691 = vmatpush.msra.mxu0 0.0
      %692 = vmatpush.msra.mxu0 0.0
      %693 = vmatpush.msra.mxu0 %v652
      %694 = vmatmul.f32.gmra.mxu0 %v656
      %v695 = vpop.f32.mrf.mxu0
      %v696 = vadd.f32 0.0, %v695
      %697 = vdwg.mxu0
      %698 = vrot.lane.b32.xlu0 %v288, 15
      %v699 = vpop.permute.xlu0 %698
      %700 = vrot.lane.b32.xlu0 %v289, 15
      %v701 = vpop.permute.xlu0 %700
      %702 = vrot.lane.b32.xlu0 %v290, 15
      %v703 = vpop.permute.xlu0 %702
      %vm704 = vcmask 121856
      %v705 = vsel %vm704, %v699, %v701
      %v706 = vsel %vm704, %v701, %v703
      %v710 = vsel %vm295, %v641, 0
      %712 = vmatpush.msra.mxu0 0.0
      %713 = vmatpush.msra.mxu0 0.0
      %714 = vmatpush.msra.mxu0 0.0
      %715 = vmatpush.msra.mxu0 0.0
      %716 = vmatpush.msra.mxu0 0.0
      %717 = vmatpush.msra.mxu0 0.0
      %718 = vmatpush.msra.mxu0 0.0
      %719 = vmatpush.msra.mxu0 0.0
      %720 = vmatpush.msra.mxu0 0.0
      %721 = vmatpush.msra.mxu0 0.0
      %722 = vmatpush.msra.mxu0 0.0
      %723 = vmatpush.msra.mxu0 0.0
      %724 = vmatpush.msra.mxu0 0.0
      %725 = vmatpush.msra.mxu0 0.0
      %726 = vmatpush.msra.mxu0 0.0
      %727 = vmatpush.msra.mxu0 %v705
      %728 = vmatmul.f32.gmra.mxu0 %v710
      %v729 = vpop.f32.mrf.mxu0
      %v730 = vadd.f32 %v676, %v729
      %731 = vdwg.mxu0
      %732 = vmatpush.msra.mxu0 0.0
      %733 = vmatpush.msra.mxu0 0.0
      %734 = vmatpush.msra.mxu0 0.0
      %735 = vmatpush.msra.mxu0 0.0
      %736 = vmatpush.msra.mxu0 0.0
      %737 = vmatpush.msra.mxu0 0.0
      %738 = vmatpush.msra.mxu0 0.0
      %739 = vmatpush.msra.mxu0 0.0
      %740 = vmatpush.msra.mxu0 0.0
      %741 = vmatpush.msra.mxu0 0.0
      %742 = vmatpush.msra.mxu0 0.0
      %743 = vmatpush.msra.mxu0 0.0
      %744 = vmatpush.msra.mxu0 0.0
      %745 = vmatpush.msra.mxu0 0.0
      %746 = vmatpush.msra.mxu0 0.0
      %747 = vmatpush.msra.mxu0 %v706
      %748 = vmatmul.f32.gmra.mxu0 %v710
      %v749 = vpop.f32.mrf.mxu0
      %v750 = vadd.f32 %v696, %v749
      %751 = vdwg.mxu0
      %s752 = scalar_lea.vmem %s3, 64
      %v753 = vld [vmem:[%s752] sm:$0xff]
      %754 = vrot.lane.b32.xlu0 %v396, 111
      %v755 = vpop.permute.xlu0 %754
      %756 = vrot.lane.b32.xlu0 %v397, 111
      %v757 = vpop.permute.xlu0 %756
      %758 = vrot.lane.b32.xlu0 %v398, 111
      %v759 = vpop.permute.xlu0 %758
      %vm760 = vcmask 908288
      %v761 = vsel %vm760, %v755, %v757
      %v762 = vsel %vm760, %v757, %v759
      %v766 = vsel %vm295, %v753, 0
      %768 = vmatpush.msra.mxu0 0.0
      %769 = vmatpush.msra.mxu0 0.0
      %770 = vmatpush.msra.mxu0 0.0
      %771 = vmatpush.msra.mxu0 0.0
      %772 = vmatpush.msra.mxu0 0.0
      %773 = vmatpush.msra.mxu0 0.0
      %774 = vmatpush.msra.mxu0 0.0
      %775 = vmatpush.msra.mxu0 0.0
      %776 = vmatpush.msra.mxu0 0.0
      %777 = vmatpush.msra.mxu0 0.0
      %778 = vmatpush.msra.mxu0 0.0
      %779 = vmatpush.msra.mxu0 0.0
      %780 = vmatpush.msra.mxu0 0.0
      %781 = vmatpush.msra.mxu0 0.0
      %782 = vmatpush.msra.mxu0 0.0
      %783 = vmatpush.msra.mxu0 %v761
      %784 = vmatmul.f32.gmra.mxu0 %v766
      %v785 = vpop.f32.mrf.mxu0
      %v786 = vadd.f32 0.0, %v785
      %787 = vdwg.mxu0
      %788 = vmatpush.msra.mxu0 0.0
      %789 = vmatpush.msra.mxu0 0.0
      %790 = vmatpush.msra.mxu0 0.0
      %791 = vmatpush.msra.mxu0 0.0
      %792 = vmatpush.msra.mxu0 0.0
      %793 = vmatpush.msra.mxu0 0.0
      %794 = vmatpush.msra.mxu0 0.0
      %795 = vmatpush.msra.mxu0 0.0
      %796 = vmatpush.msra.mxu0 0.0
      %797 = vmatpush.msra.mxu0 0.0
      %798 = vmatpush.msra.mxu0 0.0
      %799 = vmatpush.msra.mxu0 0.0
      %800 = vmatpush.msra.mxu0 0.0
      %801 = vmatpush.msra.mxu0 0.0
      %802 = vmatpush.msra.mxu0 0.0
      %803 = vmatpush.msra.mxu0 %v762
      %804 = vmatmul.f32.gmra.mxu0 %v766
      %v805 = vpop.f32.mrf.mxu0
      %v806 = vadd.f32 0.0, %v805
      %807 = vdwg.mxu0
      %v808 = vadd.f32 %v730, %v786
      %v809 = vadd.f32 %v750, %v806
      %v810 = vsel %vm638, 1, 0
      %v811 = vsel %vm639, 1, 0
      %vm812 = vcmp.eq.s32.totalorder %v810, 1
      %vm813 = vcmp.eq.s32.totalorder %v811, 1
      %v814 = vsel %vm812, %v808, 0.0
      %v815 = vsel %vm813, %v809, 0.0
      %v816 = vadd.f32 %v636, %v814
      %v817 = vadd.f32 %v637, %v815
      %818 = vst [vmem:[%s231] sm:$0xff] %v816
      %819 = vst [vmem:[%s231 + $0x8] sm:$0xff] %v817
      %v820 = vadd.f32 %v816, %v817
      %821 = vadd.xlane.f32.xlu0 %v820
      %v822 = vpop.xlane.xlu0 %821
      %v823 = vmul.f32 %v816, %v816
      %v824 = vmul.f32 %v817, %v817
      %v825 = vadd.f32 %v823, %v824
      %826 = vadd.xlane.f32.xlu0 %v825
      %v827 = vpop.xlane.xlu0 %826
      %vm828 = vcmp.eq.s32.totalorder %v262, 0
      %v829 = vsel %vm828, 1, 0
      %vm830 = vcmp.eq.s32.totalorder %v829, 1
      %v831 = vsel %vm830, %v822, %v827
      %vm832 = vcmask 15360
      %833 = vst.msk [vmem:[%s235] sm:$0xff] %vm832, %v831
      %p834 = scmp.lt.s32.totalorder %s17, 1
      %s835 = scalar_select %p834, %s17, 1
      %s836 = smul.addr %s835, 2
      %s837 = smul.addr %s836, 8
      %s838 = scalar_lea.vmem %s4, %s837
      %p839 = scmp.lt.s32.totalorder %s17, 1
      %s840 = scalar_select %p839, %s17, 1
      %s841 = smul.addr %s840, 8
      %s842 = scalar_lea.vmem %s5, %s841
      // Predicated region
      $region37: #{double_conv_forward.4} parent=35 // pred_check
        %p843 = pneg %p124
      $region38: #{double_conv_forward.4} parent=35 // pred_check_branch
        %845 = sbr.rel (%p843) target = $region40
      $region39: #{double_conv_forward.4} parent=35 // pred_region
        _
      $region40: #{double_conv_forward.4} parent=35 // pred_fallthru
        _
      // Predicated region
      $region41: #{double_conv_forward.4} parent=35 // pred_check
        %p846 = pneg %p150
      $region42: #{double_conv_forward.4} parent=35 // pred_check_branch
        %848 = sbr.rel (%p846) target = $region44
      $region43: #{double_conv_forward.4} parent=35 // pred_region
        _
      $region44: #{double_conv_forward.4} parent=35 // pred_fallthru
        _
    $region36: #{double_conv_forward.4} parent=5 // pred_fallthru
      _
    %p849 = scmp.le.s32.totalorder 2, %s12
    // Predicated region
    $region45: #{double_conv_forward.4} parent=5 // pred_check
      %p850 = pneg %p849
    $region46: #{double_conv_forward.4} parent=5 // pred_check_branch
      %852 = sbr.rel (%p850) target = $region48
    $region47: #{double_conv_forward.4} parent=5 // pred_region
      %s853 = ssub.s32 %s12, 2
      // Predicated region
      $region49: #{double_conv_forward.4} parent=47 // pred_check
        %p854 = pneg %p130
      $region50: #{double_conv_forward.4} parent=47 // pred_check_branch
        %856 = sbr.rel (%p854) target = $region52
      $region51: #{double_conv_forward.4} parent=47 // pred_region
        %p857 = scmp.lt.s32.totalorder %s18, 1
        %s858 = scalar_select %p857, %s18, 1
        %s859 = smul.addr %s858, 2
        %s860 = smul.addr %s859, 8
        %s861 = scalar_lea.vmem %s4, %s860
      $region52: #{double_conv_forward.4} parent=47 // pred_fallthru
        _
      // Predicated region
      $region53: #{double_conv_forward.4} parent=47 // pred_check
        %p862 = pneg %p156
      $region54: #{double_conv_forward.4} parent=47 // pred_check_branch
        %864 = sbr.rel (%p862) target = $region56
      $region55: #{double_conv_forward.4} parent=47 // pred_region
        %p865 = scmp.lt.s32.totalorder %s18, 1
        %s866 = scalar_select %p865, %s18, 1
        %s867 = smul.addr %s866, 8
        %s868 = scalar_lea.vmem %s5, %s867
      $region56: #{double_conv_forward.4} parent=47 // pred_fallthru
        _
    $region48: #{double_conv_forward.4} parent=5 // pred_fallthru
      _
  $region6: #{double_conv_forward.4} parent=0 // loop_footer
    %s16 = sadd.s32 1, %s12
  $region7: #{double_conv_forward.4} parent=0 // loop_footer_branch
    %11 = sbr.rel target = $region3
  $region8: #{double_conv_forward.4} parent=0 // loop_exit
    _

</llo_original>
